<compile_context>
chip_gen: v7x
topology: tpu7x:2x2x1
jax: 0.10.0
libtpu: 0.0.40
codegen_flags: <defaults>
</compile_context>

<pallas_src>
import functools

import jax
import jax.numpy as jnp
from jax import lax
from jax.experimental import pallas as pl
from jax.experimental.pallas import tpu as pltpu

LEAKY_SLOPE = 0.01   # PyTorch nn.LeakyReLU default
BN_EPS = 1e-5        # PyTorch nn.BatchNorm2d default


def _leaky(y):
    return jnp.where(y >= 0.0, y, LEAKY_SLOPE * y)


# ------------------------------ in-kernel helpers -------------------------------
def _conv3x3_chw(y_f32, w_cat, mask_l, mask_r, W):
    """3x3 'SAME' conv of an unpadded (C_in, H*W) image, channels-major layout.

    y_f32  : (C_in, S) f32 activation, S = H*W with W minor (columns on lanes).
    w_cat  : (3, C_out, 3*C_in) weights with the 3 dy taps folded into K
             (K order: dy=0 block, dy=1 block, dy=2 block).
    mask_l : (1, S) f32, 1.0 where column > 0      (validity of the dx=0 tap).
    mask_r : (1, S) f32, 1.0 where column < W - 1  (validity of the dx=2 tap).

    dy taps -> row shifts of the operand by +-W lanes (zero rows land exactly
    where the conv's zero-padding ring would be); dx taps -> +-1 lane shifts of
    the f32 accumulators, masked at row boundaries.  Accumulation is always f32.
    Returns (C_out, S) f32.
    """
    Cin, S = y_f32.shape
    zrow = jnp.zeros((Cin, W), jnp.float32)
    up = jnp.concatenate([zrow, y_f32[:, :S - W]], axis=1)   # neighbor row r-1 (dy=0)
    dn = jnp.concatenate([y_f32[:, W:], zrow], axis=1)       # neighbor row r+1 (dy=2)
    x_cat = jnp.concatenate([up, y_f32, dn], axis=0).astype(w_cat.dtype)  # (3*Cin, S)

    acc0 = jnp.dot(w_cat[0], x_cat, preferred_element_type=jnp.float32)   # dx = 0
    acc1 = jnp.dot(w_cat[1], x_cat, preferred_element_type=jnp.float32)   # dx = 1
    acc2 = jnp.dot(w_cat[2], x_cat, preferred_element_type=jnp.float32)   # dx = 2

    Cout = acc0.shape[0]
    zcol = jnp.zeros((Cout, 1), jnp.float32)
    left = jnp.concatenate([zcol, acc0[:, :S - 1]], axis=1)    # acc0[:, p-1]
    right = jnp.concatenate([acc2[:, 1:], zcol], axis=1)       # acc2[:, p+1]
    return acc1 + mask_l * left + mask_r * right


def _stats(acc):
    """Per-channel sum / sum-of-squares over the spatial axis (XLU reduce, f32)."""
    s = jnp.sum(acc, axis=1, keepdims=True)
    ss = jnp.sum(acc * acc, axis=1, keepdims=True)
    return jnp.concatenate([s, ss], axis=1)                    # (C, 2)


# ------------------------------------ kernels ------------------------------------
def _conv_stats_kernel(x_ref, w_ref, ml_ref, mr_ref, out_ref, st_ref, *, W):
    """conv1 on one whole image + per-image BN1 partial stats."""
    acc = _conv3x3_chw(x_ref[...].astype(jnp.float32), w_ref[...],
                       ml_ref[...], mr_ref[...], W)
    st_ref[...] = _stats(acc)
    out_ref[...] = acc.astype(out_ref.dtype)                   # lane-dense (C1, S)


def _bn_act_conv_stats_kernel(a_ref, w_ref, sc_ref, sh_ref, ml_ref, mr_ref,
                              out_ref, st_ref, *, W):
    """(BN1 scale/shift + LeakyReLU of block 1) fused with conv2 + BN2 partials."""
    y = _leaky(a_ref[...].astype(jnp.float32) * sc_ref[...] + sh_ref[...])
    acc = _conv3x3_chw(y, w_ref[...], ml_ref[...], mr_ref[...], W)
    st_ref[...] = _stats(acc)
    out_ref[...] = acc.astype(out_ref.dtype)                   # lane-dense (C2, S)


def _bn_act_kernel(a_ref, sc_ref, sh_ref, o_ref):
    """Final BN2 scale/shift + LeakyReLU (elementwise, f32, lane-dense store)."""
    y = _leaky(a_ref[...].astype(jnp.float32) * sc_ref[...] + sh_ref[...])
    o_ref[...] = y.astype(o_ref.dtype)


# ---------------------------- pallas_call plumbing --------------------------------
def _vmem_limit_bytes():
    """Per-generation VMEM limit: ~3/4 of physical (48 MiB v7x, 96 MiB v5e/v6e)."""
    try:
        phys = pltpu.get_tpu_info().vmem_capacity_bytes
    except Exception:
        phys = 64 * 1024 * 1024          # conservative (v7x-sized) fallback
    return int(min((phys * 3) // 4, 112 * 1024 * 1024))


def _compiler_params():
    return pltpu.CompilerParams(
        dimension_semantics=("parallel",),          # megacore sharding on v7x
        vmem_limit_bytes=_vmem_limit_bytes(),
    )


def _assert_fits_vmem(Cin, C1, C2, S, mxu_dtype):
    """Guard: one whole image per grid step must fit the per-generation budget."""
    mb = jnp.dtype(mxu_dtype).itemsize
    est = 0
    est += 2 * Cin * S * 4                        # x block (double-buffered)
    est += 2 * 2 * C1 * S * mb                    # conv1 block (producer + consumer)
    est += 2 * (C2 * S * mb + C2 * S * 4)         # conv2 block + final f32 block
    est += (9 * C1 * Cin + 9 * C2 * C1) * mb      # resident folded weights
    est += 2 * S * 4                              # resident column masks
    est += 4 * max(Cin, C1) * S * 4 + 6 * max(C1, C2) * S * 4   # in-kernel temps
    budget = int(0.8 * _vmem_limit_bytes())
    if est > budget:
        # TODO(synk): when a single image exceeds the VMEM budget (UNet-scale H*W),
        # switch to halo'd row tiles streamed in-kernel with pltpu.make_async_copy
        # (double-buffered) instead of whole-image blocks.
        raise ValueError(f"per-grid-step working set ~{est} B exceeds VMEM budget "
                         f"{budget} B; row-tiled variant not implemented")


def _call_conv_stats(x, w_cat, mask_l, mask_r, *, W, store_dtype):
    N, Cin, S = x.shape
    Cout = w_cat.shape[1]
    flops = 2 * N * S * 9 * Cin * Cout
    bytes_accessed = int(x.size * x.dtype.itemsize
                         + w_cat.size * w_cat.dtype.itemsize + 2 * S * 4
                         + N * Cout * S * jnp.dtype(store_dtype).itemsize
                         + N * Cout * 2 * 4)
    return pl.pallas_call(
        functools.partial(_conv_stats_kernel, W=W),
        grid=(N,),
        in_specs=[
            pl.BlockSpec((None, Cin, S), lambda n: (n, 0, 0)),
            pl.BlockSpec((3, Cout, 3 * Cin), lambda n: (0, 0, 0)),   # resident weights
            pl.BlockSpec((1, S), lambda n: (0, 0)),                  # resident mask_l
            pl.BlockSpec((1, S), lambda n: (0, 0)),                  # resident mask_r
        ],
        out_specs=(
            pl.BlockSpec((None, Cout, S), lambda n: (n, 0, 0)),
            pl.BlockSpec((None, Cout, 2), lambda n: (n, 0, 0)),
        ),
        out_shape=(
            jax.ShapeDtypeStruct((N, Cout, S), store_dtype),
            jax.ShapeDtypeStruct((N, Cout, 2), jnp.float32),
        ),
        compiler_params=_compiler_params(),
        cost_estimate=pl.CostEstimate(flops=flops, transcendentals=0,
                                      bytes_accessed=bytes_accessed),
    )(x, w_cat, mask_l, mask_r)


def _call_bn_conv_stats(a, w_cat, scale, shift, mask_l, mask_r, *, W, store_dtype):
    N, Cin, S = a.shape
    Cout = w_cat.shape[1]
    flops = 2 * N * S * 9 * Cin * Cout + 4 * N * Cin * S
    bytes_accessed = int(a.size * a.dtype.itemsize
                         + w_cat.size * w_cat.dtype.itemsize
                         + 2 * Cin * 4 + 2 * S * 4
                         + N * Cout * S * jnp.dtype(store_dtype).itemsize
                         + N * Cout * 2 * 4)
    return pl.pallas_call(
        functools.partial(_bn_act_conv_stats_kernel, W=W),
        grid=(N,),
        in_specs=[
            pl.BlockSpec((None, Cin, S), lambda n: (n, 0, 0)),
            pl.BlockSpec((3, Cout, 3 * Cin), lambda n: (0, 0, 0)),   # resident weights
            pl.BlockSpec((Cin, 1), lambda n: (0, 0)),                # resident scale1
            pl.BlockSpec((Cin, 1), lambda n: (0, 0)),                # resident shift1
            pl.BlockSpec((1, S), lambda n: (0, 0)),                  # resident mask_l
            pl.BlockSpec((1, S), lambda n: (0, 0)),                  # resident mask_r
        ],
        out_specs=(
            pl.BlockSpec((None, Cout, S), lambda n: (n, 0, 0)),
            pl.BlockSpec((None, Cout, 2), lambda n: (n, 0, 0)),
        ),
        out_shape=(
            jax.ShapeDtypeStruct((N, Cout, S), store_dtype),
            jax.ShapeDtypeStruct((N, Cout, 2), jnp.float32),
        ),
        compiler_params=_compiler_params(),
        cost_estimate=pl.CostEstimate(flops=flops, transcendentals=0,
                                      bytes_accessed=bytes_accessed),
    )(a, w_cat, scale, shift, mask_l, mask_r)


def _call_bn_act(a, scale, shift):
    # TODO(synk): emit bf16 here (halves writeback) if the downstream consumer allows.
    N, C, S = a.shape
    flops = 4 * N * C * S
    bytes_accessed = int(a.size * a.dtype.itemsize + N * C * S * 4 + 2 * C * 4)
    return pl.pallas_call(
        _bn_act_kernel,
        grid=(N,),
        in_specs=[
            pl.BlockSpec((None, C, S), lambda n: (n, 0, 0)),
            pl.BlockSpec((C, 1), lambda n: (0, 0)),
            pl.BlockSpec((C, 1), lambda n: (0, 0)),
        ],
        out_specs=pl.BlockSpec((None, C, S), lambda n: (n, 0, 0)),
        out_shape=jax.ShapeDtypeStruct((N, C, S), jnp.float32),
        compiler_params=_compiler_params(),
        cost_estimate=pl.CostEstimate(flops=flops, transcendentals=0,
                                      bytes_accessed=bytes_accessed),
    )(a, scale, shift)


# -------------------------------- host-side glue ----------------------------------
def _fold_weights(w_hwio, mxu_dtype):
    """HWIO (3,3,Cin,Cout) -> (3 dx taps, Cout, 3*Cin) with the dy taps folded in K."""
    kh, kw, cin, cout = w_hwio.shape
    return (jnp.transpose(w_hwio, (1, 3, 0, 2))         # (dx, Cout, dy, Cin)
            .reshape(kw, cout, kh * cin)
            .astype(mxu_dtype))


def _col_masks(H, W):
    col = jnp.arange(H * W, dtype=jnp.int32) % W
    mask_l = (col != 0).astype(jnp.float32).reshape(1, H * W)
    mask_r = (col != W - 1).astype(jnp.float32).reshape(1, H * W)
    return mask_l, mask_r


def _finalize_stats(st, count, gamma, beta):
    """Combine per-image sum/sumsq partials into BN scale/shift (tiny, f32).

    Variance is E[x^2]-E[x]^2 in f32; a Welford combine would be safer at
    production scale (noted in the review), fine for these magnitudes."""
    tot = jnp.sum(st, axis=0)                            # (C, 2)
    mean = tot[:, 0] / count
    var = jnp.maximum(tot[:, 1] / count - mean * mean, 0.0)   # biased batch variance
    scale = gamma.astype(jnp.float32) * lax.rsqrt(var + BN_EPS)
    shift = beta.astype(jnp.float32) - mean * scale
    return scale.reshape(-1, 1), shift.reshape(-1, 1)


def double_conv(x_nchw, params, *, mxu_dtype=jnp.bfloat16):
    """DoubleConv forward.  Input/output are NCHW (PyTorch convention).

    mxu_dtype: operand dtype for the conv matmuls and the HBM intermediates
    (bf16 recommended on v5e/v6e/v7x).  BN statistics, normalize and LeakyReLU
    always run in f32.
    # TODO(synk): on v7x, evaluate fp8 operands behind this knob (native fp8 MXU).
    """
    w1, g1, b1, w2, g2, b2 = params                      # conv weights in HWIO
    N, Cin, H, W = x_nchw.shape
    C1, C2 = w1.shape[-1], w2.shape[-1]
    S = H * W
    count = float(N * S)

    _assert_fits_vmem(Cin, C1, C2, S, mxu_dtype)

    x = x_nchw.reshape(N, Cin, S).astype(jnp.float32)    # free reshape, NCHW-native
    w1c = _fold_weights(w1, mxu_dtype)                   # (3, C1, 3*Cin)
    w2c = _fold_weights(w2, mxu_dtype)                   # (3, C2, 3*C1)
    mask_l, mask_r = _col_masks(H, W)

    # block 1: conv1 + per-image BN1 partial stats
    conv1, st1 = _call_conv_stats(x, w1c, mask_l, mask_r, W=W, store_dtype=mxu_dtype)
    scale1, shift1 = _finalize_stats(st1, count, g1, b1)

    # block 2: BN1 + LeakyReLU fused into conv2 (+ per-image BN2 partial stats)
    conv2, st2 = _call_bn_conv_stats(conv1, w2c, scale1, shift1, mask_l, mask_r,
                                     W=W, store_dtype=mxu_dtype)
    scale2, shift2 = _finalize_stats(st2, count, g2, b2)

    # final BN2 + LeakyReLU; result is already channel-major -> free reshape to NCHW
    y = _call_bn_act(conv2, scale2, shift2)
    return y.reshape(N, C2, H, W)


# ------------------------------- pure-JAX reference --------------------------------
def _ref_block(x_nhwc, w_hwio, gamma, beta):
    y = lax.conv_general_dilated(
        x_nhwc, w_hwio, window_strides=(1, 1), padding="SAME",
        dimension_numbers=("NHWC", "HWIO", "NHWC"))
    mean = jnp.mean(y, axis=(0, 1, 2), keepdims=True)
    var = jnp.mean((y - mean) ** 2, axis=(0, 1, 2), keepdims=True)
    y = (y - mean) * lax.rsqrt(var + BN_EPS)
    y = y * gamma.reshape(1, 1, 1, -1) + beta.reshape(1, 1, 1, -1)
    return jnp.where(y >= 0.0, y, LEAKY_SLOPE * y)


def _ref_double_conv(x_nchw, params):
    w1, g1, b1, w2, g2, b2 = params
    x = jnp.transpose(x_nchw, (0, 2, 3, 1))
    x = _ref_block(x, w1, g1, b1)
    x = _ref_block(x, w2, g2, b2)
    return jnp.transpose(x, (0, 3, 1, 2))


# --------------------------------------- main --------------------------------------
if __name__ == "__main__":
    N, Cin, Cout, H, W = 2, 4, 8, 16, 16

    key = jax.random.PRNGKey(0)
    kx, kw1, kw2 = jax.random.split(key, 3)

    x = jax.random.normal(kx, (N, Cin, H, W), jnp.float32)

    # Conv weights: generated in PyTorch OIHW shape, converted to HWIO.
    w1_oihw = jax.random.normal(kw1, (Cout, Cin, 3, 3), jnp.float32)
    w1_oihw = w1_oihw * jnp.sqrt(2.0 / (Cin * 9))
    w2_oihw = jax.random.normal(kw2, (Cout, Cout, 3, 3), jnp.float32)
    w2_oihw = w2_oihw * jnp.sqrt(2.0 / (Cout * 9))
    w1 = jnp.transpose(w1_oihw, (2, 3, 1, 0))            # OIHW -> HWIO
    w2 = jnp.transpose(w2_oihw, (2, 3, 1, 0))

    # BatchNorm affine params: PyTorch init (gamma=1, beta=0).
    g1 = jnp.ones((Cout,), jnp.float32)
    b1 = jnp.zeros((Cout,), jnp.float32)
    g2 = jnp.ones((Cout,), jnp.float32)
    b2 = jnp.zeros((Cout,), jnp.float32)
    params = (w1, g1, b1, w2, g2, b2)

    ref = jax.block_until_ready(_ref_double_conv(x, params))

    # 1) exact-math path (f32 MXU operands) -- tight tolerance vs f32 reference
    fwd_f32 = jax.jit(functools.partial(double_conv, mxu_dtype=jnp.float32))
    out_f32 = jax.block_until_ready(fwd_f32(x, params))
    assert out_f32.shape == (N, Cout, H, W), out_f32.shape
    assert jnp.allclose(out_f32, ref, atol=1e-3, rtol=1e-3), \
        float(jnp.max(jnp.abs(out_f32 - ref)))

    # 2) performance path (bf16 MXU operands, f32 stats/epilogue) -- bf16 tolerance
    fwd_bf16 = jax.jit(functools.partial(double_conv, mxu_dtype=jnp.bfloat16))
    out_bf16 = jax.block_until_ready(fwd_bf16(x, params))
    assert out_bf16.shape == (N, Cout, H, W), out_bf16.shape
    assert jnp.allclose(out_bf16, ref, atol=5e-2, rtol=5e-2), \
        float(jnp.max(jnp.abs(out_bf16 - ref)))

    print("KERNEL_OK")
</pallas_src>

<mosaic_0001>
module attributes {stable_mosaic.version = 11 : i64} {
  func.func @_conv_stats_kernel(%arg0: i32, %arg1: memref<1x4x256xf32, #tpu.memory_space<vmem>>, %arg2: memref<3x8x12xf32, #tpu.memory_space<vmem>>, %arg3: memref<1x256xf32, #tpu.memory_space<vmem>>, %arg4: memref<1x256xf32, #tpu.memory_space<vmem>>, %arg5: memref<1x8x256xf32, #tpu.memory_space<vmem>>, %arg6: memref<1x8x2xf32, #tpu.memory_space<vmem>>) attributes {dimension_semantics = [#tpu.dimension_semantics<parallel>], iteration_bounds = array<i64: 2>, scalar_prefetch = 0 : i64, scratch_operands = 0 : i64, tpu.core_type = #tpu.core_type<tc>, window_params = [{transform_indices = @transform_0, window_bounds = array<i64: 1, 4, 256>}, {pipeline_mode = #tpu.pipeline_mode<synchronous>, transform_indices = @transform_1, window_bounds = array<i64: 3, 8, 12>}, {pipeline_mode = #tpu.pipeline_mode<synchronous>, transform_indices = @transform_2, window_bounds = array<i64: 1, 256>}, {pipeline_mode = #tpu.pipeline_mode<synchronous>, transform_indices = @transform_3, window_bounds = array<i64: 1, 256>}, {transform_indices = @transform_4, window_bounds = array<i64: 1, 8, 256>}, {transform_indices = @transform_5, window_bounds = array<i64: 1, 8, 2>}]} {
    %c0 = arith.constant 0 : index
    %c0_0 = arith.constant 0 : index
    %c0_1 = arith.constant 0 : index
    %0 = vector.load %arg1[%c0, %c0_0, %c0_1] : memref<1x4x256xf32, #tpu.memory_space<vmem>>, vector<1x4x256xf32>
    %1 = vector.shape_cast %0 : vector<1x4x256xf32> to vector<4x256xf32>
    %c0_2 = arith.constant 0 : index
    %c0_3 = arith.constant 0 : index
    %c0_4 = arith.constant 0 : index
    %2 = vector.load %arg2[%c0_2, %c0_3, %c0_4] : memref<3x8x12xf32, #tpu.memory_space<vmem>>, vector<3x8x12xf32>
    %c0_5 = arith.constant 0 : index
    %c0_6 = arith.constant 0 : index
    %3 = vector.load %arg3[%c0_5, %c0_6] : memref<1x256xf32, #tpu.memory_space<vmem>>, vector<1x256xf32>
    %c0_7 = arith.constant 0 : index
    %c0_8 = arith.constant 0 : index
    %4 = vector.load %arg4[%c0_7, %c0_8] : memref<1x256xf32, #tpu.memory_space<vmem>>, vector<1x256xf32>
    %cst = arith.constant 0.000000e+00 : f32
    %5 = vector.broadcast %cst : f32 to vector<4x16xf32>
    %6 = vector.extract_strided_slice %1 {offsets = [0, 0], sizes = [4, 240], strides = [1, 1]} : vector<4x256xf32> to vector<4x240xf32>
    %7 = tpu.concatenate %5, %6 in 1 : vector<4x16xf32>, vector<4x240xf32> -> vector<4x256xf32>
    %8 = vector.extract_strided_slice %1 {offsets = [0, 16], sizes = [4, 240], strides = [1, 1]} : vector<4x256xf32> to vector<4x240xf32>
    %9 = tpu.concatenate %8, %5 in 1 : vector<4x240xf32>, vector<4x16xf32> -> vector<4x256xf32>
    %10 = tpu.concatenate %7, %1, %9 in 0 : vector<4x256xf32>, vector<4x256xf32>, vector<4x256xf32> -> vector<12x256xf32>
    %11 = vector.extract_strided_slice %2 {offsets = [0, 0, 0], sizes = [1, 8, 12], strides = [1, 1, 1]} : vector<3x8x12xf32> to vector<1x8x12xf32>
    %12 = vector.shape_cast %11 : vector<1x8x12xf32> to vector<8x12xf32>
    %cst_9 = arith.constant dense<0.000000e+00> : vector<8x256xf32>
    %13 = tpu.matmul %12, %10, %cst_9 {dimension_numbers = #tpu.dot_dimension_numbers<[1], [0], [0], [1], [0, 0, 1, 1], [], []>} : vector<8x12xf32>, vector<12x256xf32>, vector<8x256xf32> -> vector<8x256xf32>
    %14 = vector.extract_strided_slice %2 {offsets = [1, 0, 0], sizes = [1, 8, 12], strides = [1, 1, 1]} : vector<3x8x12xf32> to vector<1x8x12xf32>
    %15 = vector.shape_cast %14 : vector<1x8x12xf32> to vector<8x12xf32>
    %cst_10 = arith.constant dense<0.000000e+00> : vector<8x256xf32>
    %16 = tpu.matmul %15, %10, %cst_10 {dimension_numbers = #tpu.dot_dimension_numbers<[1], [0], [0], [1], [0, 0, 1, 1], [], []>} : vector<8x12xf32>, vector<12x256xf32>, vector<8x256xf32> -> vector<8x256xf32>
    %17 = vector.extract_strided_slice %2 {offsets = [2, 0, 0], sizes = [1, 8, 12], strides = [1, 1, 1]} : vector<3x8x12xf32> to vector<1x8x12xf32>
    %18 = vector.shape_cast %17 : vector<1x8x12xf32> to vector<8x12xf32>
    %cst_11 = arith.constant dense<0.000000e+00> : vector<8x256xf32>
    %19 = tpu.matmul %18, %10, %cst_11 {dimension_numbers = #tpu.dot_dimension_numbers<[1], [0], [0], [1], [0, 0, 1, 1], [], []>} : vector<8x12xf32>, vector<12x256xf32>, vector<8x256xf32> -> vector<8x256xf32>
    %cst_12 = arith.constant 0.000000e+00 : f32
    %20 = vector.broadcast %cst_12 : f32 to vector<8x1xf32>
    %21 = vector.extract_strided_slice %13 {offsets = [0, 0], sizes = [8, 255], strides = [1, 1]} : vector<8x256xf32> to vector<8x255xf32>
    %22 = tpu.concatenate %20, %21 in 1 : vector<8x1xf32>, vector<8x255xf32> -> vector<8x256xf32>
    %23 = vector.extract_strided_slice %19 {offsets = [0, 1], sizes = [8, 255], strides = [1, 1]} : vector<8x256xf32> to vector<8x255xf32>
    %24 = tpu.concatenate %23, %20 in 1 : vector<8x255xf32>, vector<8x1xf32> -> vector<8x256xf32>
    %25 = vector.broadcast %3 : vector<1x256xf32> to vector<8x256xf32>
    %26 = arith.mulf %25, %22 : vector<8x256xf32>
    %27 = arith.addf %16, %26 : vector<8x256xf32>
    %28 = vector.broadcast %4 : vector<1x256xf32> to vector<8x256xf32>
    %29 = arith.mulf %28, %24 : vector<8x256xf32>
    %30 = arith.addf %27, %29 : vector<8x256xf32>
    %cst_13 = arith.constant dense<0.000000e+00> : vector<8xf32>
    %31 = vector.multi_reduction <add>, %30, %cst_13 [1] : vector<8x256xf32> to vector<8xf32>
    %32 = vector.shape_cast %31 : vector<8xf32> to vector<8x1xf32>
    %33 = arith.mulf %30, %30 : vector<8x256xf32>
    %cst_14 = arith.constant dense<0.000000e+00> : vector<8xf32>
    %34 = vector.multi_reduction <add>, %33, %cst_14 [1] : vector<8x256xf32> to vector<8xf32>
    %35 = vector.shape_cast %34 : vector<8xf32> to vector<8x1xf32>
    %36 = tpu.concatenate %32, %35 in 1 : vector<8x1xf32>, vector<8x1xf32> -> vector<8x2xf32>
    %c0_15 = arith.constant 0 : index
    %c0_16 = arith.constant 0 : index
    %c0_17 = arith.constant 0 : index
    %37 = vector.load %arg6[%c0_15, %c0_16, %c0_17] : memref<1x8x2xf32, #tpu.memory_space<vmem>>, vector<1x8x2xf32>
    %38 = vector.shape_cast %37 : vector<1x8x2xf32> to vector<8x2xf32>
    %39 = vector.shape_cast %36 : vector<8x2xf32> to vector<1x8x2xf32>
    tpu.vector_store %arg6[%c0_15, %c0_16, %c0_17], %39 {strides = array<i32>} : memref<1x8x2xf32, #tpu.memory_space<vmem>>, vector<1x8x2xf32>,
    %c0_18 = arith.constant 0 : index
    %c0_19 = arith.constant 0 : index
    %c0_20 = arith.constant 0 : index
    %40 = vector.load %arg5[%c0_18, %c0_19, %c0_20] : memref<1x8x256xf32, #tpu.memory_space<vmem>>, vector<1x8x256xf32>
    %41 = vector.shape_cast %40 : vector<1x8x256xf32> to vector<8x256xf32>
    %42 = vector.shape_cast %30 : vector<8x256xf32> to vector<1x8x256xf32>
    tpu.vector_store %arg5[%c0_18, %c0_19, %c0_20], %42 {strides = array<i32>} : memref<1x8x256xf32, #tpu.memory_space<vmem>>, vector<1x8x256xf32>,
    return
  }
  func.func @transform_0(%arg0: i32) -> (i32, i32, i32) {
    %c0_i32 = arith.constant 0 : i32
    %c0_i32_0 = arith.constant 0 : i32
    %c0_i32_1 = arith.constant 0 : i32
    return %arg0, %c0_i32, %c0_i32_0 : i32, i32, i32
  }
  func.func @transform_1(%arg0: i32) -> (i32, i32, i32) {
    %c0_i32 = arith.constant 0 : i32
    %c0_i32_0 = arith.constant 0 : i32
    %c0_i32_1 = arith.constant 0 : i32
    %c0_i32_2 = arith.constant 0 : i32
    return %c0_i32, %c0_i32_0, %c0_i32_1 : i32, i32, i32
  }
  func.func @transform_2(%arg0: i32) -> (i32, i32) {
    %c0_i32 = arith.constant 0 : i32
    %c0_i32_0 = arith.constant 0 : i32
    %c0_i32_1 = arith.constant 0 : i32
    return %c0_i32, %c0_i32_0 : i32, i32
  }
  func.func @transform_3(%arg0: i32) -> (i32, i32) {
    %c0_i32 = arith.constant 0 : i32
    %c0_i32_0 = arith.constant 0 : i32
    %c0_i32_1 = arith.constant 0 : i32
    return %c0_i32, %c0_i32_0 : i32, i32
  }
  func.func @transform_4(%arg0: i32) -> (i32, i32, i32) {
    %c0_i32 = arith.constant 0 : i32
    %c0_i32_0 = arith.constant 0 : i32
    %c0_i32_1 = arith.constant 0 : i32
    return %arg0, %c0_i32, %c0_i32_0 : i32, i32, i32
  }
  func.func @transform_5(%arg0: i32) -> (i32, i32, i32) {
    %c0_i32 = arith.constant 0 : i32
    %c0_i32_0 = arith.constant 0 : i32
    %c0_i32_1 = arith.constant 0 : i32
    return %arg0, %c0_i32, %c0_i32_0 : i32, i32, i32
  }
}

module attributes {stable_mosaic.version = 11 : i64} {
  func.func @_bn_act_conv_stats_kernel(%arg0: i32, %arg1: memref<1x8x256xf32, #tpu.memory_space<vmem>>, %arg2: memref<3x8x24xf32, #tpu.memory_space<vmem>>, %arg3: memref<8x1xf32, #tpu.memory_space<vmem>>, %arg4: memref<8x1xf32, #tpu.memory_space<vmem>>, %arg5: memref<1x256xf32, #tpu.memory_space<vmem>>, %arg6: memref<1x256xf32, #tpu.memory_space<vmem>>, %arg7: memref<1x8x256xf32, #tpu.memory_space<vmem>>, %arg8: memref<1x8x2xf32, #tpu.memory_space<vmem>>) attributes {dimension_semantics = [#tpu.dimension_semantics<parallel>], iteration_bounds = array<i64: 2>, scalar_prefetch = 0 : i64, scratch_operands = 0 : i64, tpu.core_type = #tpu.core_type<tc>, window_params = [{transform_indices = @transform_0, window_bounds = array<i64: 1, 8, 256>}, {pipeline_mode = #tpu.pipeline_mode<synchronous>, transform_indices = @transform_1, window_bounds = array<i64: 3, 8, 24>}, {pipeline_mode = #tpu.pipeline_mode<synchronous>, transform_indices = @transform_2, window_bounds = array<i64: 8, 1>}, {pipeline_mode = #tpu.pipeline_mode<synchronous>, transform_indices = @transform_3, window_bounds = array<i64: 8, 1>}, {pipeline_mode = #tpu.pipeline_mode<synchronous>, transform_indices = @transform_4, window_bounds = array<i64: 1, 256>}, {pipeline_mode = #tpu.pipeline_mode<synchronous>, transform_indices = @transform_5, window_bounds = array<i64: 1, 256>}, {transform_indices = @transform_6, window_bounds = array<i64: 1, 8, 256>}, {transform_indices = @transform_7, window_bounds = array<i64: 1, 8, 2>}]} {
    %c0 = arith.constant 0 : index
    %c0_0 = arith.constant 0 : index
    %c0_1 = arith.constant 0 : index
    %0 = vector.load %arg1[%c0, %c0_0, %c0_1] : memref<1x8x256xf32, #tpu.memory_space<vmem>>, vector<1x8x256xf32>
    %1 = vector.shape_cast %0 : vector<1x8x256xf32> to vector<8x256xf32>
    %c0_2 = arith.constant 0 : index
    %c0_3 = arith.constant 0 : index
    %2 = vector.load %arg3[%c0_2, %c0_3] : memref<8x1xf32, #tpu.memory_space<vmem>>, vector<8x1xf32>
    %3 = vector.broadcast %2 : vector<8x1xf32> to vector<8x256xf32>
    %4 = arith.mulf %1, %3 : vector<8x256xf32>
    %c0_4 = arith.constant 0 : index
    %c0_5 = arith.constant 0 : index
    %5 = vector.load %arg4[%c0_4, %c0_5] : memref<8x1xf32, #tpu.memory_space<vmem>>, vector<8x1xf32>
    %6 = vector.broadcast %5 : vector<8x1xf32> to vector<8x256xf32>
    %7 = arith.addf %4, %6 : vector<8x256xf32>
    %cst = arith.constant 0.000000e+00 : f32
    %8 = vector.broadcast %cst : f32 to vector<8x256xf32>
    %9 = arith.cmpf oge, %7, %8 : vector<8x256xf32>
    %cst_6 = arith.constant 0.00999999977 : f32
    %10 = vector.broadcast %cst_6 : f32 to vector<8x256xf32>
    %11 = arith.mulf %10, %7 : vector<8x256xf32>
    %12 = arith.select %9, %7, %11 : vector<8x256xi1>, vector<8x256xf32>
    %c0_7 = arith.constant 0 : index
    %c0_8 = arith.constant 0 : index
    %c0_9 = arith.constant 0 : index
    %13 = vector.load %arg2[%c0_7, %c0_8, %c0_9] : memref<3x8x24xf32, #tpu.memory_space<vmem>>, vector<3x8x24xf32>
    %c0_10 = arith.constant 0 : index
    %c0_11 = arith.constant 0 : index
    %14 = vector.load %arg5[%c0_10, %c0_11] : memref<1x256xf32, #tpu.memory_space<vmem>>, vector<1x256xf32>
    %c0_12 = arith.constant 0 : index
    %c0_13 = arith.constant 0 : index
    %15 = vector.load %arg6[%c0_12, %c0_13] : memref<1x256xf32, #tpu.memory_space<vmem>>, vector<1x256xf32>
    %cst_14 = arith.constant 0.000000e+00 : f32
    %16 = vector.broadcast %cst_14 : f32 to vector<8x16xf32>
    %17 = vector.extract_strided_slice %12 {offsets = [0, 0], sizes = [8, 240], strides = [1, 1]} : vector<8x256xf32> to vector<8x240xf32>
    %18 = tpu.concatenate %16, %17 in 1 : vector<8x16xf32>, vector<8x240xf32> -> vector<8x256xf32>
    %19 = vector.extract_strided_slice %12 {offsets = [0, 16], sizes = [8, 240], strides = [1, 1]} : vector<8x256xf32> to vector<8x240xf32>
    %20 = tpu.concatenate %19, %16 in 1 : vector<8x240xf32>, vector<8x16xf32> -> vector<8x256xf32>
    %21 = tpu.concatenate %18, %12, %20 in 0 : vector<8x256xf32>, vector<8x256xf32>, vector<8x256xf32> -> vector<24x256xf32>
    %22 = vector.extract_strided_slice %13 {offsets = [0, 0, 0], sizes = [1, 8, 24], strides = [1, 1, 1]} : vector<3x8x24xf32> to vector<1x8x24xf32>
    %23 = vector.shape_cast %22 : vector<1x8x24xf32> to vector<8x24xf32>
    %cst_15 = arith.constant dense<0.000000e+00> : vector<8x256xf32>
    %24 = tpu.matmul %23, %21, %cst_15 {dimension_numbers = #tpu.dot_dimension_numbers<[1], [0], [0], [1], [0, 0, 1, 1], [], []>} : vector<8x24xf32>, vector<24x256xf32>, vector<8x256xf32> -> vector<8x256xf32>
    %25 = vector.extract_strided_slice %13 {offsets = [1, 0, 0], sizes = [1, 8, 24], strides = [1, 1, 1]} : vector<3x8x24xf32> to vector<1x8x24xf32>
    %26 = vector.shape_cast %25 : vector<1x8x24xf32> to vector<8x24xf32>
    %cst_16 = arith.constant dense<0.000000e+00> : vector<8x256xf32>
    %27 = tpu.matmul %26, %21, %cst_16 {dimension_numbers = #tpu.dot_dimension_numbers<[1], [0], [0], [1], [0, 0, 1, 1], [], []>} : vector<8x24xf32>, vector<24x256xf32>, vector<8x256xf32> -> vector<8x256xf32>
    %28 = vector.extract_strided_slice %13 {offsets = [2, 0, 0], sizes = [1, 8, 24], strides = [1, 1, 1]} : vector<3x8x24xf32> to vector<1x8x24xf32>
    %29 = vector.shape_cast %28 : vector<1x8x24xf32> to vector<8x24xf32>
    %cst_17 = arith.constant dense<0.000000e+00> : vector<8x256xf32>
    %30 = tpu.matmul %29, %21, %cst_17 {dimension_numbers = #tpu.dot_dimension_numbers<[1], [0], [0], [1], [0, 0, 1, 1], [], []>} : vector<8x24xf32>, vector<24x256xf32>, vector<8x256xf32> -> vector<8x256xf32>
    %cst_18 = arith.constant 0.000000e+00 : f32
    %31 = vector.broadcast %cst_18 : f32 to vector<8x1xf32>
    %32 = vector.extract_strided_slice %24 {offsets = [0, 0], sizes = [8, 255], strides = [1, 1]} : vector<8x256xf32> to vector<8x255xf32>
    %33 = tpu.concatenate %31, %32 in 1 : vector<8x1xf32>, vector<8x255xf32> -> vector<8x256xf32>
    %34 = vector.extract_strided_slice %30 {offsets = [0, 1], sizes = [8, 255], strides = [1, 1]} : vector<8x256xf32> to vector<8x255xf32>
    %35 = tpu.concatenate %34, %31 in 1 : vector<8x255xf32>, vector<8x1xf32> -> vector<8x256xf32>
    %36 = vector.broadcast %14 : vector<1x256xf32> to vector<8x256xf32>
    %37 = arith.mulf %36, %33 : vector<8x256xf32>
    %38 = arith.addf %27, %37 : vector<8x256xf32>
    %39 = vector.broadcast %15 : vector<1x256xf32> to vector<8x256xf32>
    %40 = arith.mulf %39, %35 : vector<8x256xf32>
    %41 = arith.addf %38, %40 : vector<8x256xf32>
    %cst_19 = arith.constant dense<0.000000e+00> : vector<8xf32>
    %42 = vector.multi_reduction <add>, %41, %cst_19 [1] : vector<8x256xf32> to vector<8xf32>
    %43 = vector.shape_cast %42 : vector<8xf32> to vector<8x1xf32>
    %44 = arith.mulf %41, %41 : vector<8x256xf32>
    %cst_20 = arith.constant dense<0.000000e+00> : vector<8xf32>
    %45 = vector.multi_reduction <add>, %44, %cst_20 [1] : vector<8x256xf32> to vector<8xf32>
    %46 = vector.shape_cast %45 : vector<8xf32> to vector<8x1xf32>
    %47 = tpu.concatenate %43, %46 in 1 : vector<8x1xf32>, vector<8x1xf32> -> vector<8x2xf32>
    %c0_21 = arith.constant 0 : index
    %c0_22 = arith.constant 0 : index
    %c0_23 = arith.constant 0 : index
    %48 = vector.load %arg8[%c0_21, %c0_22, %c0_23] : memref<1x8x2xf32, #tpu.memory_space<vmem>>, vector<1x8x2xf32>
    %49 = vector.shape_cast %48 : vector<1x8x2xf32> to vector<8x2xf32>
    %50 = vector.shape_cast %47 : vector<8x2xf32> to vector<1x8x2xf32>
    tpu.vector_store %arg8[%c0_21, %c0_22, %c0_23], %50 {strides = array<i32>} : memref<1x8x2xf32, #tpu.memory_space<vmem>>, vector<1x8x2xf32>,
    %c0_24 = arith.constant 0 : index
    %c0_25 = arith.constant 0 : index
    %c0_26 = arith.constant 0 : index
    %51 = vector.load %arg7[%c0_24, %c0_25, %c0_26] : memref<1x8x256xf32, #tpu.memory_space<vmem>>, vector<1x8x256xf32>
    %52 = vector.shape_cast %51 : vector<1x8x256xf32> to vector<8x256xf32>
    %53 = vector.shape_cast %41 : vector<8x256xf32> to vector<1x8x256xf32>
    tpu.vector_store %arg7[%c0_24, %c0_25, %c0_26], %53 {strides = array<i32>} : memref<1x8x256xf32, #tpu.memory_space<vmem>>, vector<1x8x256xf32>,
    return
  }
  func.func @transform_0(%arg0: i32) -> (i32, i32, i32) {
    %c0_i32 = arith.constant 0 : i32
    %c0_i32_0 = arith.constant 0 : i32
    %c0_i32_1 = arith.constant 0 : i32
    return %arg0, %c0_i32, %c0_i32_0 : i32, i32, i32
  }
  func.func @transform_1(%arg0: i32) -> (i32, i32, i32) {
    %c0_i32 = arith.constant 0 : i32
    %c0_i32_0 = arith.constant 0 : i32
    %c0_i32_1 = arith.constant 0 : i32
    %c0_i32_2 = arith.constant 0 : i32
    return %c0_i32, %c0_i32_0, %c0_i32_1 : i32, i32, i32
  }
  func.func @transform_2(%arg0: i32) -> (i32, i32) {
    %c0_i32 = arith.constant 0 : i32
    %c0_i32_0 = arith.constant 0 : i32
    %c0_i32_1 = arith.constant 0 : i32
    return %c0_i32, %c0_i32_0 : i32, i32
  }
  func.func @transform_3(%arg0: i32) -> (i32, i32) {
    %c0_i32 = arith.constant 0 : i32
    %c0_i32_0 = arith.constant 0 : i32
    %c0_i32_1 = arith.constant 0 : i32
    return %c0_i32, %c0_i32_0 : i32, i32
  }
  func.func @transform_4(%arg0: i32) -> (i32, i32) {
    %c0_i32 = arith.constant 0 : i32
    %c0_i32_0 = arith.constant 0 : i32
    %c0_i32_1 = arith.constant 0 : i32
    return %c0_i32, %c0_i32_0 : i32, i32
  }
  func.func @transform_5(%arg0: i32) -> (i32, i32) {
    %c0_i32 = arith.constant 0 : i32
    %c0_i32_0 = arith.constant 0 : i32
    %c0_i32_1 = arith.constant 0 : i32
    return %c0_i32, %c0_i32_0 : i32, i32
  }
  func.func @transform_6(%arg0: i32) -> (i32, i32, i32) {
    %c0_i32 = arith.constant 0 : i32
    %c0_i32_0 = arith.constant 0 : i32
    %c0_i32_1 = arith.constant 0 : i32
    return %arg0, %c0_i32, %c0_i32_0 : i32, i32, i32
  }
  func.func @transform_7(%arg0: i32) -> (i32, i32, i32) {
    %c0_i32 = arith.constant 0 : i32
    %c0_i32_0 = arith.constant 0 : i32
    %c0_i32_1 = arith.constant 0 : i32
    return %arg0, %c0_i32, %c0_i32_0 : i32, i32, i32
  }
}

module attributes {stable_mosaic.version = 11 : i64} {
  func.func @_bn_act_kernel(%arg0: i32, %arg1: memref<1x8x256xf32, #tpu.memory_space<vmem>>, %arg2: memref<8x1xf32, #tpu.memory_space<vmem>>, %arg3: memref<8x1xf32, #tpu.memory_space<vmem>>, %arg4: memref<1x8x256xf32, #tpu.memory_space<vmem>>) attributes {dimension_semantics = [#tpu.dimension_semantics<parallel>], iteration_bounds = array<i64: 2>, scalar_prefetch = 0 : i64, scratch_operands = 0 : i64, tpu.core_type = #tpu.core_type<tc>, window_params = [{transform_indices = @transform_0, window_bounds = array<i64: 1, 8, 256>}, {pipeline_mode = #tpu.pipeline_mode<synchronous>, transform_indices = @transform_1, window_bounds = array<i64: 8, 1>}, {pipeline_mode = #tpu.pipeline_mode<synchronous>, transform_indices = @transform_2, window_bounds = array<i64: 8, 1>}, {transform_indices = @transform_3, window_bounds = array<i64: 1, 8, 256>}]} {
    %c0 = arith.constant 0 : index
    %c0_0 = arith.constant 0 : index
    %c0_1 = arith.constant 0 : index
    %0 = vector.load %arg1[%c0, %c0_0, %c0_1] : memref<1x8x256xf32, #tpu.memory_space<vmem>>, vector<1x8x256xf32>
    %1 = vector.shape_cast %0 : vector<1x8x256xf32> to vector<8x256xf32>
    %c0_2 = arith.constant 0 : index
    %c0_3 = arith.constant 0 : index
    %2 = vector.load %arg2[%c0_2, %c0_3] : memref<8x1xf32, #tpu.memory_space<vmem>>, vector<8x1xf32>
    %3 = vector.broadcast %2 : vector<8x1xf32> to vector<8x256xf32>
    %4 = arith.mulf %1, %3 : vector<8x256xf32>
    %c0_4 = arith.constant 0 : index
    %c0_5 = arith.constant 0 : index
    %5 = vector.load %arg3[%c0_4, %c0_5] : memref<8x1xf32, #tpu.memory_space<vmem>>, vector<8x1xf32>
    %6 = vector.broadcast %5 : vector<8x1xf32> to vector<8x256xf32>
    %7 = arith.addf %4, %6 : vector<8x256xf32>
    %cst = arith.constant 0.000000e+00 : f32
    %8 = vector.broadcast %cst : f32 to vector<8x256xf32>
    %9 = arith.cmpf oge, %7, %8 : vector<8x256xf32>
    %cst_6 = arith.constant 0.00999999977 : f32
    %10 = vector.broadcast %cst_6 : f32 to vector<8x256xf32>
    %11 = arith.mulf %10, %7 : vector<8x256xf32>
    %12 = arith.select %9, %7, %11 : vector<8x256xi1>, vector<8x256xf32>
    %c0_7 = arith.constant 0 : index
    %c0_8 = arith.constant 0 : index
    %c0_9 = arith.constant 0 : index
    %13 = vector.load %arg4[%c0_7, %c0_8, %c0_9] : memref<1x8x256xf32, #tpu.memory_space<vmem>>, vector<1x8x256xf32>
    %14 = vector.shape_cast %13 : vector<1x8x256xf32> to vector<8x256xf32>
    %15 = vector.shape_cast %12 : vector<8x256xf32> to vector<1x8x256xf32>
    tpu.vector_store %arg4[%c0_7, %c0_8, %c0_9], %15 {strides = array<i32>} : memref<1x8x256xf32, #tpu.memory_space<vmem>>, vector<1x8x256xf32>,
    return
  }
  func.func @transform_0(%arg0: i32) -> (i32, i32, i32) {
    %c0_i32 = arith.constant 0 : i32
    %c0_i32_0 = arith.constant 0 : i32
    %c0_i32_1 = arith.constant 0 : i32
    return %arg0, %c0_i32, %c0_i32_0 : i32, i32, i32
  }
  func.func @transform_1(%arg0: i32) -> (i32, i32) {
    %c0_i32 = arith.constant 0 : i32
    %c0_i32_0 = arith.constant 0 : i32
    %c0_i32_1 = arith.constant 0 : i32
    return %c0_i32, %c0_i32_0 : i32, i32
  }
  func.func @transform_2(%arg0: i32) -> (i32, i32) {
    %c0_i32 = arith.constant 0 : i32
    %c0_i32_0 = arith.constant 0 : i32
    %c0_i32_1 = arith.constant 0 : i32
    return %c0_i32, %c0_i32_0 : i32, i32
  }
  func.func @transform_3(%arg0: i32) -> (i32, i32, i32) {
    %c0_i32 = arith.constant 0 : i32
    %c0_i32_0 = arith.constant 0 : i32
    %c0_i32_1 = arith.constant 0 : i32
    return %arg0, %c0_i32, %c0_i32_0 : i32, i32, i32
  }
}

</mosaic_0001>

<llo_original>
// kernel: double_conv.5
$region0: #{double_conv.5}
  #allocation0 [shape = 'u32[]', space=smem, size = 0x4, offset = 0x4, fixed_abs, tag = 'smem constant byte address 0x4 - core index']
  #allocation1 [shape = 'u32[144,128]{1,0:T(1,128)}', space=vmem, size = 0x12000, scoped, tag = 'internal scratch']
  %s0 = inlined_call_operand.vmem [shape: f32[2,8,256], index: 0, kind: input, shape index: {}]
  %s1 = inlined_call_operand.vmem [shape: f32[8,1], index: 1, kind: input, shape index: {}]
  %s2 = inlined_call_operand.vmem [shape: f32[8,1], index: 2, kind: input, shape index: {}]
  %s3 = inlined_call_operand.vmem [shape: f32[2,8,256], index: 3, kind: output, shape index: {}]
  %s4 = sld [smem:[#allocation0]]
  $region45: #{double_conv.5} parent=0
    _
  %s6 = ssub.s32 1, %s4
  %s7 = scalar_select 0, %s6, %s4
  loop: start=0, step=1, limit=4
  $region2: #{double_conv.5} parent=0 // loop_pre_header
    _
  $region3: #{double_conv.5} parent=0 // loop_header
    %s9 = sphi 0, %s13
    %p10 = scmp.ge.s32.totalorder %s9, 4
    %s19 = sphi 0, %s21
    %s22 = sphi 0, %s19
    %s23 = sphi 0, %s22
    %s39 = sphi 0, %s23
    %s43 = sphi 0, %s43
    %s45 = sphi 0, %s43
    %s46 = sphi 0, %s45
    %s60 = sphi 0, %s46
    %s64 = sphi 0, %s64
    %s66 = sphi 0, %s64
    %s67 = sphi 0, %s66
    %s81 = sphi 0, %s67
    %s87 = sphi 0, %s89
    %s90 = sphi 0, %s87
    %s91 = sphi 0, %s90
    %s107 = sphi 0, %s91
  $region4: #{double_conv.5} parent=0 // loop_header_branch
    %12 = sbr.rel (%p10) target = $region8
  $region5: #{double_conv.5} parent=0 // loop_body
    %s14 = ssub.s32 %s9, 1
    %s15 = ssub.s32 %s9, 2
    %s16 = sadd.s32 %s9, 1
    %s17 = ssub.s32 %s9, %s16
    %p18 = scmp.eq.s32.totalorder %s17, 0
    %s20 = sadd.s32 %s19, 1
    %s21 = scalar_select %p18, %s19, %s20
    %p24 = pneg %p18
    %p25 = scmp.eq.s32.totalorder %s9, 1
    %p26 = por %p24, %p25
    %p27 = scmp.ne.s32.totalorder %s19, %s22
    %p28 = scmp.eq.s32.totalorder %s9, 0
    %p29 = por %p27, %p28
    %p30 = scmp.ne.s32.totalorder %s19, %s22
    %p31 = scmp.eq.s32.totalorder %s14, 1
    %p32 = por %p30, %p31
    %p33 = scmp.ne.s32.totalorder %s22, %s23
    %p34 = scmp.eq.s32.totalorder %s14, 0
    %p35 = por %p33, %p34
    %p36 = scmp.ne.s32.totalorder %s22, %s23
    %p37 = scmp.eq.s32.totalorder %s15, 1
    %p38 = por %p36, %p37
    %p40 = scmp.ne.s32.totalorder %s23, %s39
    %p41 = scmp.eq.s32.totalorder %s15, 0
    %p42 = por %p40, %p41
    %s44 = sadd.s32 %s43, 1
    %p47 = scmp.eq.s32.totalorder %s9, 1
    %p48 = scmp.ne.s32.totalorder %s43, %s45
    %p49 = scmp.eq.s32.totalorder %s9, 0
    %p50 = por %p48, %p49
    %p51 = scmp.ne.s32.totalorder %s43, %s45
    %p52 = scmp.eq.s32.totalorder %s14, 1
    %p53 = por %p51, %p52
    %p54 = scmp.ne.s32.totalorder %s45, %s46
    %p55 = scmp.eq.s32.totalorder %s14, 0
    %p56 = por %p54, %p55
    %p57 = scmp.ne.s32.totalorder %s45, %s46
    %p58 = scmp.eq.s32.totalorder %s15, 1
    %p59 = por %p57, %p58
    %p61 = scmp.ne.s32.totalorder %s46, %s60
    %p62 = scmp.eq.s32.totalorder %s15, 0
    %p63 = por %p61, %p62
    %s65 = sadd.s32 %s64, 1
    %p68 = scmp.eq.s32.totalorder %s9, 1
    %p69 = scmp.ne.s32.totalorder %s64, %s66
    %p70 = scmp.eq.s32.totalorder %s9, 0
    %p71 = por %p69, %p70
    %p72 = scmp.ne.s32.totalorder %s64, %s66
    %p73 = scmp.eq.s32.totalorder %s14, 1
    %p74 = por %p72, %p73
    %p75 = scmp.ne.s32.totalorder %s66, %s67
    %p76 = scmp.eq.s32.totalorder %s14, 0
    %p77 = por %p75, %p76
    %p78 = scmp.ne.s32.totalorder %s66, %s67
    %p79 = scmp.eq.s32.totalorder %s15, 1
    %p80 = por %p78, %p79
    %p82 = scmp.ne.s32.totalorder %s67, %s81
    %p83 = scmp.eq.s32.totalorder %s15, 0
    %p84 = por %p82, %p83
    %s85 = ssub.s32 %s9, %s16
    %p86 = scmp.eq.s32.totalorder %s85, 0
    %s88 = sadd.s32 %s87, 1
    %s89 = scalar_select %p86, %s87, %s88
    %p92 = pneg %p86
    %p93 = scmp.eq.s32.totalorder %s9, 1
    %p94 = por %p92, %p93
    %p95 = scmp.ne.s32.totalorder %s87, %s90
    %p96 = scmp.eq.s32.totalorder %s9, 0
    %p97 = por %p95, %p96
    %p98 = scmp.ne.s32.totalorder %s87, %s90
    %p99 = scmp.eq.s32.totalorder %s14, 1
    %p100 = por %p98, %p99
    %p101 = scmp.ne.s32.totalorder %s90, %s91
    %p102 = scmp.eq.s32.totalorder %s14, 0
    %p103 = por %p101, %p102
    %p104 = scmp.ne.s32.totalorder %s90, %s91
    %p105 = scmp.eq.s32.totalorder %s15, 1
    %p106 = por %p104, %p105
    %p108 = scmp.ne.s32.totalorder %s91, %s107
    %p109 = scmp.eq.s32.totalorder %s15, 0
    %p110 = por %p108, %p109
    %p111 = scmp.le.s32.totalorder 1, %s9
    %p112 = scmp.lt.s32.totalorder %s9, 3
    %p113 = pnand %p111, %p112
    %p114 = pneg %p113
    // Predicated region
    $region9: #{double_conv.5} parent=5 // pred_check
      _
    $region10: #{double_conv.5} parent=5 // pred_check_branch
      %116 = sbr.rel (%p113) target = $region12
    $region11: #{double_conv.5} parent=5 // pred_region
      %s117 = ssub.s32 %s9, 1
      // Predicated region
      $region13: #{double_conv.5} parent=11 // pred_check
        %p118 = pneg %p56
      $region14: #{double_conv.5} parent=11 // pred_check_branch
        %120 = sbr.rel (%p118) target = $region16
      $region15: #{double_conv.5} parent=11 // pred_region
        _
      $region16: #{double_conv.5} parent=11 // pred_fallthru
        _
      // Predicated region
      $region17: #{double_conv.5} parent=11 // pred_check
        %p121 = pneg %p77
      $region18: #{double_conv.5} parent=11 // pred_check_branch
        %123 = sbr.rel (%p121) target = $region20
      $region19: #{double_conv.5} parent=11 // pred_region
        _
      $region20: #{double_conv.5} parent=11 // pred_fallthru
        _
    $region12: #{double_conv.5} parent=5 // pred_fallthru
      _
    %p124 = scmp.lt.s32.totalorder %s9, 2
    // Predicated region
    $region21: #{double_conv.5} parent=5 // pred_check
      %p125 = pneg %p124
    $region22: #{double_conv.5} parent=5 // pred_check_branch
      %127 = sbr.rel (%p125) target = $region24
    $region23: #{double_conv.5} parent=5 // pred_region
      // Predicated region
      $region25: #{double_conv.5} parent=23 // pred_check
        %p128 = pneg %p29
      $region26: #{double_conv.5} parent=23 // pred_check_branch
        %130 = sbr.rel (%p128) target = $region28
      $region27: #{double_conv.5} parent=23 // pred_region
        %p131 = scmp.lt.s32.totalorder %s9, 1
        %s132 = scalar_select %p131, %s9, 1
        %s133 = smul.addr %s132, 2
        %s134 = smul.addr %s133, 8
        %s135 = scalar_lea.vmem %s0, %s134
      $region28: #{double_conv.5} parent=23 // pred_fallthru
        _
    $region24: #{double_conv.5} parent=5 // pred_fallthru
      _
    %p136 = scmp.le.s32.totalorder 1, %s9
    %p137 = scmp.lt.s32.totalorder %s9, 3
    %p138 = pnand %p136, %p137
    %p139 = pneg %p138
    // Predicated region
    $region29: #{double_conv.5} parent=5 // pred_check
      _
    $region30: #{double_conv.5} parent=5 // pred_check_branch
      %141 = sbr.rel (%p138) target = $region32
    $region31: #{double_conv.5} parent=5 // pred_region
      %s142 = ssub.s32 %s9, 1
      %p143 = scmp.lt.s32.totalorder %s14, 1
      %s144 = scalar_select %p143, %s14, 1
      %s145 = smul.addr %s144, 2
      %s146 = smul.addr %s145, 8
      %s147 = scalar_lea.vmem %s0, %s146
      %p148 = pneg %p35
      %p149 = pneg %p32
      %p150 = pneg %p56
      %p151 = pneg %p53
      %p152 = pneg %p77
      %p153 = pneg %p74
      %p154 = pneg %p103
      %p155 = pneg %p100
      %p156 = scmp.lt.s32.totalorder %s14, 1
      %s157 = scalar_select %p156, %s14, 1
      %s158 = smul.addr %s157, 2
      %s159 = smul.addr %s158, 8
      %s160 = scalar_lea.vmem %s3, %s159
      %p161 = scmp.lt.s32.totalorder %s14, 1
      %s162 = scalar_select %p161, %s14, 1
      %s163 = smul.addr %s162, 2
      %s164 = smul.addr %s163, 8
      %s165 = scalar_lea.vmem %s0, %s164
      %p166 = scmp.lt.s32.totalorder %s14, 1
      %s167 = scalar_select %p166, %s14, 1
      %s168 = smul.addr %s167, 2
      %s169 = smul.addr %s168, 8
      %s170 = scalar_lea.vmem %s3, %s169
      %v171 = vld [vmem:[%s165] sm:$0xff]
      %v172 = vld [vmem:[%s165 + $0x8] sm:$0xff]
      %v173 = vld [vmem:[%s1] sm:$0xff]
      %175 = vset.pattern.permute.xlu0 0
      %176 = vperm.xlu0 %175, %v173
      %v177 = vpop.permute.xlu0 %176
      %v179 = vmul.f32 %v171, %v177
      %v180 = vmul.f32 %v172, %v177
      %v181 = vld [vmem:[%s2] sm:$0xff]
      %183 = vset.pattern.permute.xlu0 0
      %184 = vperm.xlu0 %183, %v181
      %v185 = vpop.permute.xlu0 %184
      %v187 = vadd.f32 %v179, %v185
      %v188 = vadd.f32 %v180, %v185
      %vm189 = vcmp.ge.f32.partialorder %v187, 0.0
      %vm190 = vcmp.ge.f32.partialorder %v188, 0.0
      %v191 = vmul.f32 %v187, 0.01
      %v192 = vmul.f32 %v188, 0.01
      %v193 = vsel %vm189, %v187, %v191
      %v194 = vsel %vm190, %v188, %v192
      %195 = vst [vmem:[%s170] sm:$0xff] %v193
      %196 = vst [vmem:[%s170 + $0x8] sm:$0xff] %v194
      %p197 = scmp.lt.s32.totalorder %s14, 1
      %s198 = scalar_select %p197, %s14, 1
      %s199 = smul.addr %s198, 2
      %s200 = smul.addr %s199, 8
      %s201 = scalar_lea.vmem %s3, %s200
      // Predicated region
      $region33: #{double_conv.5} parent=31 // pred_check
        %p202 = pneg %p100
      $region34: #{double_conv.5} parent=31 // pred_check_branch
        %204 = sbr.rel (%p202) target = $region36
      $region35: #{double_conv.5} parent=31 // pred_region
        _
      $region36: #{double_conv.5} parent=31 // pred_fallthru
        _
    $region32: #{double_conv.5} parent=5 // pred_fallthru
      _
    %p205 = scmp.le.s32.totalorder 2, %s9
    // Predicated region
    $region37: #{double_conv.5} parent=5 // pred_check
      %p206 = pneg %p205
    $region38: #{double_conv.5} parent=5 // pred_check_branch
      %208 = sbr.rel (%p206) target = $region40
    $region39: #{double_conv.5} parent=5 // pred_region
      %s209 = ssub.s32 %s9, 2
      // Predicated region
      $region41: #{double_conv.5} parent=39 // pred_check
        %p210 = pneg %p106
      $region42: #{double_conv.5} parent=39 // pred_check_branch
        %212 = sbr.rel (%p210) target = $region44
      $region43: #{double_conv.5} parent=39 // pred_region
        %p213 = scmp.lt.s32.totalorder %s15, 1
        %s214 = scalar_select %p213, %s15, 1
        %s215 = smul.addr %s214, 2
        %s216 = smul.addr %s215, 8
        %s217 = scalar_lea.vmem %s3, %s216
      $region44: #{double_conv.5} parent=39 // pred_fallthru
        _
    $region40: #{double_conv.5} parent=5 // pred_fallthru
      _
  $region6: #{double_conv.5} parent=0 // loop_footer
    %s13 = sadd.s32 1, %s9
  $region7: #{double_conv.5} parent=0 // loop_footer_branch
    %8 = sbr.rel target = $region3
  $region8: #{double_conv.5} parent=0 // loop_exit
    _

// kernel: double_conv.3
$region0: #{double_conv.3}
  #allocation0 [shape = 'u32[]', space=smem, size = 0x4, offset = 0x4, fixed_abs, tag = 'smem constant byte address 0x4 - core index']
  #allocation1 [shape = 'u32[144,128]{1,0:T(1,128)}', space=vmem, size = 0x12000, scoped, tag = 'internal scratch']
  %s0 = inlined_call_operand.vmem [shape: f32[2,4,256], index: 0, kind: input, shape index: {}]
  %s1 = inlined_call_operand.vmem [shape: f32[3,8,12], index: 1, kind: input, shape index: {}]
  %s2 = inlined_call_operand.vmem [shape: f32[1,256], index: 2, kind: input, shape index: {}]
  %s3 = inlined_call_operand.vmem [shape: f32[1,256], index: 3, kind: input, shape index: {}]
  %s4 = inlined_call_operand.vmem [shape: f32[2,8,256], index: 4, kind: output, shape index: {0}]
  %s5 = inlined_call_operand.vmem [shape: f32[2,8,2], index: 5, kind: output, shape index: {1}]
  %6 = xla_tuple %s4, %s5
  %s7 = sld [smem:[#allocation0]]
  $region57: #{double_conv.3} parent=0
    _
  %s9 = ssub.s32 1, %s7
  %s10 = scalar_select 0, %s9, %s7
  loop: start=0, step=1, limit=4
  $region2: #{double_conv.3} parent=0 // loop_pre_header
    _
  $region3: #{double_conv.3} parent=0 // loop_header
    %s12 = sphi 0, %s16
    %p13 = scmp.ge.s32.totalorder %s12, 4
    %s22 = sphi 0, %s24
    %s25 = sphi 0, %s22
    %s26 = sphi 0, %s25
    %s42 = sphi 0, %s26
    %s46 = sphi 0, %s46
    %s48 = sphi 0, %s46
    %s49 = sphi 0, %s48
    %s63 = sphi 0, %s49
    %s67 = sphi 0, %s67
    %s69 = sphi 0, %s67
    %s70 = sphi 0, %s69
    %s84 = sphi 0, %s70
    %s88 = sphi 0, %s88
    %s90 = sphi 0, %s88
    %s91 = sphi 0, %s90
    %s105 = sphi 0, %s91
    %s111 = sphi 0, %s113
    %s114 = sphi 0, %s111
    %s115 = sphi 0, %s114
    %s131 = sphi 0, %s115
    %s137 = sphi 0, %s139
    %s140 = sphi 0, %s137
    %s141 = sphi 0, %s140
    %s157 = sphi 0, %s141
  $region4: #{double_conv.3} parent=0 // loop_header_branch
    %15 = sbr.rel (%p13) target = $region8
  $region5: #{double_conv.3} parent=0 // loop_body
    %s17 = ssub.s32 %s12, 1
    %s18 = ssub.s32 %s12, 2
    %s19 = sadd.s32 %s12, 1
    %s20 = ssub.s32 %s12, %s19
    %p21 = scmp.eq.s32.totalorder %s20, 0
    %s23 = sadd.s32 %s22, 1
    %s24 = scalar_select %p21, %s22, %s23
    %p27 = pneg %p21
    %p28 = scmp.eq.s32.totalorder %s12, 1
    %p29 = por %p27, %p28
    %p30 = scmp.ne.s32.totalorder %s22, %s25
    %p31 = scmp.eq.s32.totalorder %s12, 0
    %p32 = por %p30, %p31
    %p33 = scmp.ne.s32.totalorder %s22, %s25
    %p34 = scmp.eq.s32.totalorder %s17, 1
    %p35 = por %p33, %p34
    %p36 = scmp.ne.s32.totalorder %s25, %s26
    %p37 = scmp.eq.s32.totalorder %s17, 0
    %p38 = por %p36, %p37
    %p39 = scmp.ne.s32.totalorder %s25, %s26
    %p40 = scmp.eq.s32.totalorder %s18, 1
    %p41 = por %p39, %p40
    %p43 = scmp.ne.s32.totalorder %s26, %s42
    %p44 = scmp.eq.s32.totalorder %s18, 0
    %p45 = por %p43, %p44
    %s47 = sadd.s32 %s46, 1
    %p50 = scmp.eq.s32.totalorder %s12, 1
    %p51 = scmp.ne.s32.totalorder %s46, %s48
    %p52 = scmp.eq.s32.totalorder %s12, 0
    %p53 = por %p51, %p52
    %p54 = scmp.ne.s32.totalorder %s46, %s48
    %p55 = scmp.eq.s32.totalorder %s17, 1
    %p56 = por %p54, %p55
    %p57 = scmp.ne.s32.totalorder %s48, %s49
    %p58 = scmp.eq.s32.totalorder %s17, 0
    %p59 = por %p57, %p58
    %p60 = scmp.ne.s32.totalorder %s48, %s49
    %p61 = scmp.eq.s32.totalorder %s18, 1
    %p62 = por %p60, %p61
    %p64 = scmp.ne.s32.totalorder %s49, %s63
    %p65 = scmp.eq.s32.totalorder %s18, 0
    %p66 = por %p64, %p65
    %s68 = sadd.s32 %s67, 1
    %p71 = scmp.eq.s32.totalorder %s12, 1
    %p72 = scmp.ne.s32.totalorder %s67, %s69
    %p73 = scmp.eq.s32.totalorder %s12, 0
    %p74 = por %p72, %p73
    %p75 = scmp.ne.s32.totalorder %s67, %s69
    %p76 = scmp.eq.s32.totalorder %s17, 1
    %p77 = por %p75, %p76
    %p78 = scmp.ne.s32.totalorder %s69, %s70
    %p79 = scmp.eq.s32.totalorder %s17, 0
    %p80 = por %p78, %p79
    %p81 = scmp.ne.s32.totalorder %s69, %s70
    %p82 = scmp.eq.s32.totalorder %s18, 1
    %p83 = por %p81, %p82
    %p85 = scmp.ne.s32.totalorder %s70, %s84
    %p86 = scmp.eq.s32.totalorder %s18, 0
    %p87 = por %p85, %p86
    %s89 = sadd.s32 %s88, 1
    %p92 = scmp.eq.s32.totalorder %s12, 1
    %p93 = scmp.ne.s32.totalorder %s88, %s90
    %p94 = scmp.eq.s32.totalorder %s12, 0
    %p95 = por %p93, %p94
    %p96 = scmp.ne.s32.totalorder %s88, %s90
    %p97 = scmp.eq.s32.totalorder %s17, 1
    %p98 = por %p96, %p97
    %p99 = scmp.ne.s32.totalorder %s90, %s91
    %p100 = scmp.eq.s32.totalorder %s17, 0
    %p101 = por %p99, %p100
    %p102 = scmp.ne.s32.totalorder %s90, %s91
    %p103 = scmp.eq.s32.totalorder %s18, 1
    %p104 = por %p102, %p103
    %p106 = scmp.ne.s32.totalorder %s91, %s105
    %p107 = scmp.eq.s32.totalorder %s18, 0
    %p108 = por %p106, %p107
    %s109 = ssub.s32 %s12, %s19
    %p110 = scmp.eq.s32.totalorder %s109, 0
    %s112 = sadd.s32 %s111, 1
    %s113 = scalar_select %p110, %s111, %s112
    %p116 = pneg %p110
    %p117 = scmp.eq.s32.totalorder %s12, 1
    %p118 = por %p116, %p117
    %p119 = scmp.ne.s32.totalorder %s111, %s114
    %p120 = scmp.eq.s32.totalorder %s12, 0
    %p121 = por %p119, %p120
    %p122 = scmp.ne.s32.totalorder %s111, %s114
    %p123 = scmp.eq.s32.totalorder %s17, 1
    %p124 = por %p122, %p123
    %p125 = scmp.ne.s32.totalorder %s114, %s115
    %p126 = scmp.eq.s32.totalorder %s17, 0
    %p127 = por %p125, %p126
    %p128 = scmp.ne.s32.totalorder %s114, %s115
    %p129 = scmp.eq.s32.totalorder %s18, 1
    %p130 = por %p128, %p129
    %p132 = scmp.ne.s32.totalorder %s115, %s131
    %p133 = scmp.eq.s32.totalorder %s18, 0
    %p134 = por %p132, %p133
    %s135 = ssub.s32 %s12, %s19
    %p136 = scmp.eq.s32.totalorder %s135, 0
    %s138 = sadd.s32 %s137, 1
    %s139 = scalar_select %p136, %s137, %s138
    %p142 = pneg %p136
    %p143 = scmp.eq.s32.totalorder %s12, 1
    %p144 = por %p142, %p143
    %p145 = scmp.ne.s32.totalorder %s137, %s140
    %p146 = scmp.eq.s32.totalorder %s12, 0
    %p147 = por %p145, %p146
    %p148 = scmp.ne.s32.totalorder %s137, %s140
    %p149 = scmp.eq.s32.totalorder %s17, 1
    %p150 = por %p148, %p149
    %p151 = scmp.ne.s32.totalorder %s140, %s141
    %p152 = scmp.eq.s32.totalorder %s17, 0
    %p153 = por %p151, %p152
    %p154 = scmp.ne.s32.totalorder %s140, %s141
    %p155 = scmp.eq.s32.totalorder %s18, 1
    %p156 = por %p154, %p155
    %p158 = scmp.ne.s32.totalorder %s141, %s157
    %p159 = scmp.eq.s32.totalorder %s18, 0
    %p160 = por %p158, %p159
    %p161 = scmp.le.s32.totalorder 1, %s12
    %p162 = scmp.lt.s32.totalorder %s12, 3
    %p163 = pnand %p161, %p162
    %p164 = pneg %p163
    // Predicated region
    $region9: #{double_conv.3} parent=5 // pred_check
      _
    $region10: #{double_conv.3} parent=5 // pred_check_branch
      %166 = sbr.rel (%p163) target = $region12
    $region11: #{double_conv.3} parent=5 // pred_region
      %s167 = ssub.s32 %s12, 1
      // Predicated region
      $region13: #{double_conv.3} parent=11 // pred_check
        %p168 = pneg %p59
      $region14: #{double_conv.3} parent=11 // pred_check_branch
        %170 = sbr.rel (%p168) target = $region16
      $region15: #{double_conv.3} parent=11 // pred_region
        _
      $region16: #{double_conv.3} parent=11 // pred_fallthru
        _
      // Predicated region
      $region17: #{double_conv.3} parent=11 // pred_check
        %p171 = pneg %p80
      $region18: #{double_conv.3} parent=11 // pred_check_branch
        %173 = sbr.rel (%p171) target = $region20
      $region19: #{double_conv.3} parent=11 // pred_region
        _
      $region20: #{double_conv.3} parent=11 // pred_fallthru
        _
      // Predicated region
      $region21: #{double_conv.3} parent=11 // pred_check
        %p174 = pneg %p101
      $region22: #{double_conv.3} parent=11 // pred_check_branch
        %176 = sbr.rel (%p174) target = $region24
      $region23: #{double_conv.3} parent=11 // pred_region
        _
      $region24: #{double_conv.3} parent=11 // pred_fallthru
        _
    $region12: #{double_conv.3} parent=5 // pred_fallthru
      _
    %p177 = scmp.lt.s32.totalorder %s12, 2
    // Predicated region
    $region25: #{double_conv.3} parent=5 // pred_check
      %p178 = pneg %p177
    $region26: #{double_conv.3} parent=5 // pred_check_branch
      %180 = sbr.rel (%p178) target = $region28
    $region27: #{double_conv.3} parent=5 // pred_region
      // Predicated region
      $region29: #{double_conv.3} parent=27 // pred_check
        %p181 = pneg %p32
      $region30: #{double_conv.3} parent=27 // pred_check_branch
        %183 = sbr.rel (%p181) target = $region32
      $region31: #{double_conv.3} parent=27 // pred_region
        %p184 = scmp.lt.s32.totalorder %s12, 1
        %s185 = scalar_select %p184, %s12, 1
        %s186 = smul.addr %s185, 2
        %s187 = smul.addr %s186, 4
        %s188 = scalar_lea.vmem %s0, %s187
      $region32: #{double_conv.3} parent=27 // pred_fallthru
        _
    $region28: #{double_conv.3} parent=5 // pred_fallthru
      _
    %p189 = scmp.le.s32.totalorder 1, %s12
    %p190 = scmp.lt.s32.totalorder %s12, 3
    %p191 = pnand %p189, %p190
    %p192 = pneg %p191
    // Predicated region
    $region33: #{double_conv.3} parent=5 // pred_check
      _
    $region34: #{double_conv.3} parent=5 // pred_check_branch
      %194 = sbr.rel (%p191) target = $region36
    $region35: #{double_conv.3} parent=5 // pred_region
      %s195 = ssub.s32 %s12, 1
      %p196 = scmp.lt.s32.totalorder %s17, 1
      %s197 = scalar_select %p196, %s17, 1
      %s198 = smul.addr %s197, 2
      %s199 = smul.addr %s198, 4
      %s200 = scalar_lea.vmem %s0, %s199
      %p201 = pneg %p38
      %p202 = pneg %p35
      %p203 = pneg %p59
      %p204 = pneg %p56
      %p205 = pneg %p80
      %p206 = pneg %p77
      %p207 = pneg %p101
      %p208 = pneg %p98
      %p209 = pneg %p127
      %p210 = pneg %p124
      %p211 = scmp.lt.s32.totalorder %s17, 1
      %s212 = scalar_select %p211, %s17, 1
      %s213 = smul.addr %s212, 2
      %s214 = smul.addr %s213, 8
      %s215 = scalar_lea.vmem %s4, %s214
      %p216 = pneg %p153
      %p217 = pneg %p150
      %p218 = scmp.lt.s32.totalorder %s17, 1
      %s219 = scalar_select %p218, %s17, 1
      %s220 = smul.addr %s219, 8
      %s221 = scalar_lea.vmem %s5, %s220
      %p222 = scmp.lt.s32.totalorder %s17, 1
      %s223 = scalar_select %p222, %s17, 1
      %s224 = smul.addr %s223, 2
      %s225 = smul.addr %s224, 4
      %s226 = scalar_lea.vmem %s0, %s225
      %p227 = scmp.lt.s32.totalorder %s17, 1
      %s228 = scalar_select %p227, %s17, 1
      %s229 = smul.addr %s228, 2
      %s230 = smul.addr %s229, 8
      %s231 = scalar_lea.vmem %s4, %s230
      %p232 = scmp.lt.s32.totalorder %s17, 1
      %s233 = scalar_select %p232, %s17, 1
      %s234 = smul.addr %s233, 8
      %s235 = scalar_lea.vmem %s5, %s234
      %v236 = vld [vmem:[%s226] sm:$0xff]
      %v237 = vld [vmem:[%s1] sm:$0xff]
      %v238 = vld [vmem:[%s1 + $0x8] sm:$0xff]
      %v239 = vld [vmem:[%s1 + $0x10] sm:$0xff]
      %v240 = vld [vmem:[%s2] sm:$0x3]
      %v241 = vld [vmem:[%s3] sm:$0x3]
      %v243 = vcombine.high %v236, %v236
      %244 = vrot.lane.b32.xlu0 %v236, 16
      %v245 = vpop.permute.xlu0 %244
      %246 = vrot.lane.b32.xlu0 %v243, 16
      %v247 = vpop.permute.xlu0 %246
      %vm248 = vcmask 130048
      %v249 = vsel %vm248, %v245, %v247
      %v252 = vsel %vm248, 0.0, %v245
      %253 = vrot.lane.b32.xlu0 %v236, 112
      %v254 = vpop.permute.xlu0 %253
      %255 = vrot.lane.b32.xlu0 %v243, 112
      %v256 = vpop.permute.xlu0 %255
      %vm257 = vcmask 916480
      %v258 = vsel %vm257, %v254, %v256
      %v260 = vsel %vm257, %v256, 0.0
      %v261 = vcombine.low %v236, %v236
      %vm263 = vcmask 1043456
      %v264 = vsel %vm263, %v252, %v261
      %v265 = vsel %vm263, %v249, %v236
      %vm266 = vcmask 97280
      %v268 = vsel %vm266, %v237, 0
      %v270 = vsel %vm263, %v258, 0
      %v273 = vsel %vm263, %v260, 0
      %275 = vmatprep.subr.mxu0 %v265
      %276 = vmatpush1.msra.mxu0 %v264
      %277 = vmatprep.subr.mxu0 %v273
      %278 = vmatpush1.msra.mxu0 %v270
      %279 = vmatprep.subr.mxu0 0.0
      %280 = vmatpush1.msra.mxu0 0.0
      %281 = vmatprep.subr.mxu0 0.0
      %282 = vmatpush1.msra.mxu0 0.0
      %283 = vmatprep.subr.mxu0 0.0
      %284 = vmatpush1.msra.mxu0 0.0
      %285 = vmatprep.subr.mxu0 0.0
      %286 = vmatpush1.msra.mxu0 0.0
      %287 = vmatprep.subr.mxu0 0.0
      %288 = vmatpush1.msra.mxu0 0.0
      %289 = vmatprep.subr.mxu0 0.0
      %290 = vmatpush1.msra.mxu0 0.0
      %291 = vmatprep.subr.mxu0 0.0
      %292 = vmatpush1.msra.mxu0 0.0
      %293 = vmatprep.subr.mxu0 0.0
      %294 = vmatpush1.msra.mxu0 0.0
      %295 = vmatprep.subr.mxu0 0.0
      %296 = vmatpush1.msra.mxu0 0.0
      %297 = vmatprep.subr.mxu0 0.0
      %298 = vmatpush1.msra.mxu0 0.0
      %299 = vmatprep.subr.mxu0 0.0
      %300 = vmatpush1.msra.mxu0 0.0
      %301 = vmatprep.subr.mxu0 0.0
      %302 = vmatpush1.msra.mxu0 0.0
      %303 = vmatprep.subr.mxu0 0.0
      %304 = vmatpush1.msra.mxu0 0.0
      %305 = vmatprep.subr.mxu0 0.0
      %306 = vmatpush1.msra.mxu0 0.0
      %307 = vmatprep.subr.mxu0 0.0
      %308 = vmatpush1.msra.mxu0 0.0
      %309 = vmatprep.subr.mxu0 0.0
      %310 = vmatpush1.msra.mxu0 0.0
      %311 = vmatprep.subr.mxu0 0.0
      %312 = vmatpush1.msra.mxu0 0.0
      %313 = vmatprep.subr.mxu0 0.0
      %314 = vmatpush1.msra.mxu0 0.0
      %315 = vmatprep.subr.mxu0 0.0
      %316 = vmatpush1.msra.mxu0 0.0
      %317 = vmatprep.subr.mxu0 0.0
      %318 = vmatpush1.msra.mxu0 0.0
      %319 = vmatprep.subr.mxu0 0.0
      %320 = vmatpush1.msra.mxu0 0.0
      %321 = vmatprep.subr.mxu0 0.0
      %322 = vmatpush1.msra.mxu0 0.0
      %323 = vmatprep.subr.mxu0 0.0
      %324 = vmatpush1.msra.mxu0 0.0
      %325 = vmatprep.subr.mxu0 0.0
      %326 = vmatpush1.msra.mxu0 0.0
      %327 = vmatprep.subr.mxu0 0.0
      %328 = vmatpush1.msra.mxu0 0.0
      %329 = vmatprep.subr.mxu0 0.0
      %330 = vmatpush1.msra.mxu0 0.0
      %331 = vmatprep.subr.mxu0 0.0
      %332 = vmatpush1.msra.mxu0 0.0
      %333 = vmatprep.subr.mxu0 0.0
      %334 = vmatpush1.msra.mxu0 0.0
      %335 = vmatprep.subr.mxu0 0.0
      %336 = vmatpush1.msra.mxu0 0.0
      %337 = vmatprep.subr.mxu0 0.0
      %338 = vmatpush1.msra.mxu0 0.0
      %339 = vmatprep.mubr.f32.mxu0 0.0
      %340 = vmatmul.mubr.f32.gmra.mrb[0].mxu0 %v268
      %v341 = vpop.f32.mrb[0].mxu0
      %v342 = vadd.f32 0.0, %v341
      %v343 = vpop.f32.mrb[0].mxu0
      %v344 = vadd.f32 0.0, %v343
      %345 = vdwg.mxu0
      %v347 = vsel %vm266, %v239, 0
      %349 = vmatprep.subr.mxu0 %v265
      %350 = vmatpush1.msra.mxu0 %v264
      %351 = vmatprep.subr.mxu0 %v273
      %352 = vmatpush1.msra.mxu0 %v270
      %353 = vmatprep.subr.mxu0 0.0
      %354 = vmatpush1.msra.mxu0 0.0
      %355 = vmatprep.subr.mxu0 0.0
      %356 = vmatpush1.msra.mxu0 0.0
      %357 = vmatprep.subr.mxu0 0.0
      %358 = vmatpush1.msra.mxu0 0.0
      %359 = vmatprep.subr.mxu0 0.0
      %360 = vmatpush1.msra.mxu0 0.0
      %361 = vmatprep.subr.mxu0 0.0
      %362 = vmatpush1.msra.mxu0 0.0
      %363 = vmatprep.subr.mxu0 0.0
      %364 = vmatpush1.msra.mxu0 0.0
      %365 = vmatprep.subr.mxu0 0.0
      %366 = vmatpush1.msra.mxu0 0.0
      %367 = vmatprep.subr.mxu0 0.0
      %368 = vmatpush1.msra.mxu0 0.0
      %369 = vmatprep.subr.mxu0 0.0
      %370 = vmatpush1.msra.mxu0 0.0
      %371 = vmatprep.subr.mxu0 0.0
      %372 = vmatpush1.msra.mxu0 0.0
      %373 = vmatprep.subr.mxu0 0.0
      %374 = vmatpush1.msra.mxu0 0.0
      %375 = vmatprep.subr.mxu0 0.0
      %376 = vmatpush1.msra.mxu0 0.0
      %377 = vmatprep.subr.mxu0 0.0
      %378 = vmatpush1.msra.mxu0 0.0
      %379 = vmatprep.subr.mxu0 0.0
      %380 = vmatpush1.msra.mxu0 0.0
      %381 = vmatprep.subr.mxu0 0.0
      %382 = vmatpush1.msra.mxu0 0.0
      %383 = vmatprep.subr.mxu0 0.0
      %384 = vmatpush1.msra.mxu0 0.0
      %385 = vmatprep.subr.mxu0 0.0
      %386 = vmatpush1.msra.mxu0 0.0
      %387 = vmatprep.subr.mxu0 0.0
      %388 = vmatpush1.msra.mxu0 0.0
      %389 = vmatprep.subr.mxu0 0.0
      %390 = vmatpush1.msra.mxu0 0.0
      %391 = vmatprep.subr.mxu0 0.0
      %392 = vmatpush1.msra.mxu0 0.0
      %393 = vmatprep.subr.mxu0 0.0
      %394 = vmatpush1.msra.mxu0 0.0
      %395 = vmatprep.subr.mxu0 0.0
      %396 = vmatpush1.msra.mxu0 0.0
      %397 = vmatprep.subr.mxu0 0.0
      %398 = vmatpush1.msra.mxu0 0.0
      %399 = vmatprep.subr.mxu0 0.0
      %400 = vmatpush1.msra.mxu0 0.0
      %401 = vmatprep.subr.mxu0 0.0
      %402 = vmatpush1.msra.mxu0 0.0
      %403 = vmatprep.subr.mxu0 0.0
      %404 = vmatpush1.msra.mxu0 0.0
      %405 = vmatprep.subr.mxu0 0.0
      %406 = vmatpush1.msra.mxu0 0.0
      %407 = vmatprep.subr.mxu0 0.0
      %408 = vmatpush1.msra.mxu0 0.0
      %409 = vmatprep.subr.mxu0 0.0
      %410 = vmatpush1.msra.mxu0 0.0
      %411 = vmatprep.subr.mxu0 0.0
      %412 = vmatpush1.msra.mxu0 0.0
      %413 = vmatprep.mubr.f32.mxu0 0.0
      %414 = vmatmul.mubr.f32.gmra.mrb[0].mxu0 %v347
      %v415 = vpop.f32.mrb[0].mxu0
      %v416 = vadd.f32 0.0, %v415
      %v417 = vpop.f32.mrb[0].mxu0
      %v418 = vadd.f32 0.0, %v417
      %419 = vdwg.mxu0
      %422 = vrot.lane.b32.xlu0 %v342, 1
      %v423 = vpop.permute.xlu0 %422
      %424 = vrot.lane.b32.xlu0 %v344, 1
      %v425 = vpop.permute.xlu0 %424
      %vm426 = vcmask 7168
      %v427 = vsel %vm426, %v423, %v425
      %v430 = vsel %vm426, 0.0, %v423
      %433 = vrot.lane.b32.xlu0 %v416, 127
      %v434 = vpop.permute.xlu0 %433
      %435 = vrot.lane.b32.xlu0 %v418, 127
      %v436 = vpop.permute.xlu0 %435
      %vm437 = vcmask 1039360
      %v438 = vsel %vm437, %v434, %v436
      %v441 = vsel %vm437, %v436, 0.0
      %v443 = vlaneseq
      %v444 = vshrl.u32 %v443, 7
      %v445 = vsub.s32 0, %v444
      %v446 = vrot.slane %v240, %v445
      %v447 = vlaneseq
      %v448 = vshrl.u32 %v447, 7
      %v449 = vsub.s32 1, %v448
      %v450 = vrot.slane %v240, %v449
      %v453 = vmul.f32 %v446, %v430
      %v454 = vmul.f32 %v450, %v427
      %v456 = vsel %vm266, %v238, 0
      %458 = vmatprep.subr.mxu0 %v265
      %459 = vmatpush1.msra.mxu0 %v264
      %460 = vmatprep.subr.mxu0 %v273
      %461 = vmatpush1.msra.mxu0 %v270
      %462 = vmatprep.subr.mxu0 0.0
      %463 = vmatpush1.msra.mxu0 0.0
      %464 = vmatprep.subr.mxu0 0.0
      %465 = vmatpush1.msra.mxu0 0.0
      %466 = vmatprep.subr.mxu0 0.0
      %467 = vmatpush1.msra.mxu0 0.0
      %468 = vmatprep.subr.mxu0 0.0
      %469 = vmatpush1.msra.mxu0 0.0
      %470 = vmatprep.subr.mxu0 0.0
      %471 = vmatpush1.msra.mxu0 0.0
      %472 = vmatprep.subr.mxu0 0.0
      %473 = vmatpush1.msra.mxu0 0.0
      %474 = vmatprep.subr.mxu0 0.0
      %475 = vmatpush1.msra.mxu0 0.0
      %476 = vmatprep.subr.mxu0 0.0
      %477 = vmatpush1.msra.mxu0 0.0
      %478 = vmatprep.subr.mxu0 0.0
      %479 = vmatpush1.msra.mxu0 0.0
      %480 = vmatprep.subr.mxu0 0.0
      %481 = vmatpush1.msra.mxu0 0.0
      %482 = vmatprep.subr.mxu0 0.0
      %483 = vmatpush1.msra.mxu0 0.0
      %484 = vmatprep.subr.mxu0 0.0
      %485 = vmatpush1.msra.mxu0 0.0
      %486 = vmatprep.subr.mxu0 0.0
      %487 = vmatpush1.msra.mxu0 0.0
      %488 = vmatprep.subr.mxu0 0.0
      %489 = vmatpush1.msra.mxu0 0.0
      %490 = vmatprep.subr.mxu0 0.0
      %491 = vmatpush1.msra.mxu0 0.0
      %492 = vmatprep.subr.mxu0 0.0
      %493 = vmatpush1.msra.mxu0 0.0
      %494 = vmatprep.subr.mxu0 0.0
      %495 = vmatpush1.msra.mxu0 0.0
      %496 = vmatprep.subr.mxu0 0.0
      %497 = vmatpush1.msra.mxu0 0.0
      %498 = vmatprep.subr.mxu0 0.0
      %499 = vmatpush1.msra.mxu0 0.0
      %500 = vmatprep.subr.mxu0 0.0
      %501 = vmatpush1.msra.mxu0 0.0
      %502 = vmatprep.subr.mxu0 0.0
      %503 = vmatpush1.msra.mxu0 0.0
      %504 = vmatprep.subr.mxu0 0.0
      %505 = vmatpush1.msra.mxu0 0.0
      %506 = vmatprep.subr.mxu0 0.0
      %507 = vmatpush1.msra.mxu0 0.0
      %508 = vmatprep.subr.mxu0 0.0
      %509 = vmatpush1.msra.mxu0 0.0
      %510 = vmatprep.subr.mxu0 0.0
      %511 = vmatpush1.msra.mxu0 0.0
      %512 = vmatprep.subr.mxu0 0.0
      %513 = vmatpush1.msra.mxu0 0.0
      %514 = vmatprep.subr.mxu0 0.0
      %515 = vmatpush1.msra.mxu0 0.0
      %516 = vmatprep.subr.mxu0 0.0
      %517 = vmatpush1.msra.mxu0 0.0
      %518 = vmatprep.subr.mxu0 0.0
      %519 = vmatpush1.msra.mxu0 0.0
      %520 = vmatprep.subr.mxu0 0.0
      %521 = vmatpush1.msra.mxu0 0.0
      %522 = vmatprep.mubr.f32.mxu0 0.0
      %523 = vmatmul.mubr.f32.gmra.mrb[0].mxu0 %v456
      %v524 = vpop.f32.mrb[0].mxu0
      %v525 = vadd.f32 %v453, %v524
      %v526 = vpop.f32.mrb[0].mxu0
      %v527 = vadd.f32 %v454, %v526
      %528 = vdwg.mxu0
      %v530 = vlaneseq
      %v531 = vshrl.u32 %v530, 7
      %v532 = vsub.s32 0, %v531
      %v533 = vrot.slane %v241, %v532
      %v534 = vlaneseq
      %v535 = vshrl.u32 %v534, 7
      %v536 = vsub.s32 1, %v535
      %v537 = vrot.slane %v241, %v536
      %v540 = vmul.f32 %v533, %v438
      %v541 = vmul.f32 %v537, %v441
      %v542 = vadd.f32 %v525, %v540
      %v543 = vadd.f32 %v527, %v541
      %v544 = vadd.f32 %v542, %v543
      %545 = vadd.xlane.f32.xlu0 %v544
      %v546 = vpop.xlane.xlu0 %545
      %v547 = vmul.f32 %v542, %v542
      %v548 = vmul.f32 %v543, %v543
      %v549 = vadd.f32 %v547, %v548
      %550 = vadd.xlane.f32.xlu0 %v549
      %v551 = vpop.xlane.xlu0 %550
      %v552 = vsel %vm426, %v546, %v551
      %vm553 = vcmask 15360
      %554 = vst.msk [vmem:[%s235] sm:$0xff] %vm553, %v552
      %555 = vst [vmem:[%s231] sm:$0xff] %v542
      %556 = vst [vmem:[%s231 + $0x8] sm:$0xff] %v543
      %p557 = scmp.lt.s32.totalorder %s17, 1
      %s558 = scalar_select %p557, %s17, 1
      %s559 = smul.addr %s558, 2
      %s560 = smul.addr %s559, 8
      %s561 = scalar_lea.vmem %s4, %s560
      %p562 = scmp.lt.s32.totalorder %s17, 1
      %s563 = scalar_select %p562, %s17, 1
      %s564 = smul.addr %s563, 8
      %s565 = scalar_lea.vmem %s5, %s564
      // Predicated region
      $region37: #{double_conv.3} parent=35 // pred_check
        %p566 = pneg %p124
      $region38: #{double_conv.3} parent=35 // pred_check_branch
        %568 = sbr.rel (%p566) target = $region40
      $region39: #{double_conv.3} parent=35 // pred_region
        _
      $region40: #{double_conv.3} parent=35 // pred_fallthru
        _
      // Predicated region
      $region41: #{double_conv.3} parent=35 // pred_check
        %p569 = pneg %p150
      $region42: #{double_conv.3} parent=35 // pred_check_branch
        %571 = sbr.rel (%p569) target = $region44
      $region43: #{double_conv.3} parent=35 // pred_region
        _
      $region44: #{double_conv.3} parent=35 // pred_fallthru
        _
    $region36: #{double_conv.3} parent=5 // pred_fallthru
      _
    %p572 = scmp.le.s32.totalorder 2, %s12
    // Predicated region
    $region45: #{double_conv.3} parent=5 // pred_check
      %p573 = pneg %p572
    $region46: #{double_conv.3} parent=5 // pred_check_branch
      %575 = sbr.rel (%p573) target = $region48
    $region47: #{double_conv.3} parent=5 // pred_region
      %s576 = ssub.s32 %s12, 2
      // Predicated region
      $region49: #{double_conv.3} parent=47 // pred_check
        %p577 = pneg %p130
      $region50: #{double_conv.3} parent=47 // pred_check_branch
        %579 = sbr.rel (%p577) target = $region52
      $region51: #{double_conv.3} parent=47 // pred_region
        %p580 = scmp.lt.s32.totalorder %s18, 1
        %s581 = scalar_select %p580, %s18, 1
        %s582 = smul.addr %s581, 2
        %s583 = smul.addr %s582, 8
        %s584 = scalar_lea.vmem %s4, %s583
      $region52: #{double_conv.3} parent=47 // pred_fallthru
        _
      // Predicated region
      $region53: #{double_conv.3} parent=47 // pred_check
        %p585 = pneg %p156
      $region54: #{double_conv.3} parent=47 // pred_check_branch
        %587 = sbr.rel (%p585) target = $region56
      $region55: #{double_conv.3} parent=47 // pred_region
        %p588 = scmp.lt.s32.totalorder %s18, 1
        %s589 = scalar_select %p588, %s18, 1
        %s590 = smul.addr %s589, 8
        %s591 = scalar_lea.vmem %s5, %s590
      $region56: #{double_conv.3} parent=47 // pred_fallthru
        _
    $region48: #{double_conv.3} parent=5 // pred_fallthru
      _
  $region6: #{double_conv.3} parent=0 // loop_footer
    %s16 = sadd.s32 1, %s12
  $region7: #{double_conv.3} parent=0 // loop_footer_branch
    %11 = sbr.rel target = $region3
  $region8: #{double_conv.3} parent=0 // loop_exit
    _

// kernel: double_conv.4
$region0: #{double_conv.4}
  #allocation0 [shape = 'u32[]', space=smem, size = 0x4, offset = 0x4, fixed_abs, tag = 'smem constant byte address 0x4 - core index']
  #allocation1 [shape = 'u32[144,128]{1,0:T(1,128)}', space=vmem, size = 0x12000, scoped, tag = 'internal scratch']
  %s0 = inlined_call_operand.vmem [shape: f32[2,8,256], index: 0, kind: input, shape index: {}]
  %s1 = inlined_call_operand.vmem [shape: f32[3,8,24], index: 1, kind: input, shape index: {}]
  %s2 = inlined_call_operand.vmem [shape: f32[8,1], index: 2, kind: input, shape index: {}]
  %s3 = inlined_call_operand.vmem [shape: f32[8,1], index: 3, kind: input, shape index: {}]
  %s4 = inlined_call_operand.vmem [shape: f32[1,256], index: 4, kind: input, shape index: {}]
  %s5 = inlined_call_operand.vmem [shape: f32[1,256], index: 5, kind: input, shape index: {}]
  %s6 = inlined_call_operand.vmem [shape: f32[2,8,256], index: 6, kind: output, shape index: {0}]
  %s7 = inlined_call_operand.vmem [shape: f32[2,8,2], index: 7, kind: output, shape index: {1}]
  %8 = xla_tuple %s6, %s7
  %s9 = sld [smem:[#allocation0]]
  $region65: #{double_conv.4} parent=0
    _
  %s11 = ssub.s32 1, %s9
  %s12 = scalar_select 0, %s11, %s9
  loop: start=0, step=1, limit=4
  $region2: #{double_conv.4} parent=0 // loop_pre_header
    _
  $region3: #{double_conv.4} parent=0 // loop_header
    %s14 = sphi 0, %s18
    %p15 = scmp.ge.s32.totalorder %s14, 4
    %s24 = sphi 0, %s26
    %s27 = sphi 0, %s24
    %s28 = sphi 0, %s27
    %s44 = sphi 0, %s28
    %s48 = sphi 0, %s48
    %s50 = sphi 0, %s48
    %s51 = sphi 0, %s50
    %s65 = sphi 0, %s51
    %s69 = sphi 0, %s69
    %s71 = sphi 0, %s69
    %s72 = sphi 0, %s71
    %s86 = sphi 0, %s72
    %s90 = sphi 0, %s90
    %s92 = sphi 0, %s90
    %s93 = sphi 0, %s92
    %s107 = sphi 0, %s93
    %s111 = sphi 0, %s111
    %s113 = sphi 0, %s111
    %s114 = sphi 0, %s113
    %s128 = sphi 0, %s114
    %s132 = sphi 0, %s132
    %s134 = sphi 0, %s132
    %s135 = sphi 0, %s134
    %s149 = sphi 0, %s135
    %s155 = sphi 0, %s157
    %s158 = sphi 0, %s155
    %s159 = sphi 0, %s158
    %s175 = sphi 0, %s159
    %s181 = sphi 0, %s183
    %s184 = sphi 0, %s181
    %s185 = sphi 0, %s184
    %s201 = sphi 0, %s185
  $region4: #{double_conv.4} parent=0 // loop_header_branch
    %17 = sbr.rel (%p15) target = $region8
  $region5: #{double_conv.4} parent=0 // loop_body
    %s19 = ssub.s32 %s14, 1
    %s20 = ssub.s32 %s14, 2
    %s21 = sadd.s32 %s14, 1
    %s22 = ssub.s32 %s14, %s21
    %p23 = scmp.eq.s32.totalorder %s22, 0
    %s25 = sadd.s32 %s24, 1
    %s26 = scalar_select %p23, %s24, %s25
    %p29 = pneg %p23
    %p30 = scmp.eq.s32.totalorder %s14, 1
    %p31 = por %p29, %p30
    %p32 = scmp.ne.s32.totalorder %s24, %s27
    %p33 = scmp.eq.s32.totalorder %s14, 0
    %p34 = por %p32, %p33
    %p35 = scmp.ne.s32.totalorder %s24, %s27
    %p36 = scmp.eq.s32.totalorder %s19, 1
    %p37 = por %p35, %p36
    %p38 = scmp.ne.s32.totalorder %s27, %s28
    %p39 = scmp.eq.s32.totalorder %s19, 0
    %p40 = por %p38, %p39
    %p41 = scmp.ne.s32.totalorder %s27, %s28
    %p42 = scmp.eq.s32.totalorder %s20, 1
    %p43 = por %p41, %p42
    %p45 = scmp.ne.s32.totalorder %s28, %s44
    %p46 = scmp.eq.s32.totalorder %s20, 0
    %p47 = por %p45, %p46
    %s49 = sadd.s32 %s48, 1
    %p52 = scmp.eq.s32.totalorder %s14, 1
    %p53 = scmp.ne.s32.totalorder %s48, %s50
    %p54 = scmp.eq.s32.totalorder %s14, 0
    %p55 = por %p53, %p54
    %p56 = scmp.ne.s32.totalorder %s48, %s50
    %p57 = scmp.eq.s32.totalorder %s19, 1
    %p58 = por %p56, %p57
    %p59 = scmp.ne.s32.totalorder %s50, %s51
    %p60 = scmp.eq.s32.totalorder %s19, 0
    %p61 = por %p59, %p60
    %p62 = scmp.ne.s32.totalorder %s50, %s51
    %p63 = scmp.eq.s32.totalorder %s20, 1
    %p64 = por %p62, %p63
    %p66 = scmp.ne.s32.totalorder %s51, %s65
    %p67 = scmp.eq.s32.totalorder %s20, 0
    %p68 = por %p66, %p67
    %s70 = sadd.s32 %s69, 1
    %p73 = scmp.eq.s32.totalorder %s14, 1
    %p74 = scmp.ne.s32.totalorder %s69, %s71
    %p75 = scmp.eq.s32.totalorder %s14, 0
    %p76 = por %p74, %p75
    %p77 = scmp.ne.s32.totalorder %s69, %s71
    %p78 = scmp.eq.s32.totalorder %s19, 1
    %p79 = por %p77, %p78
    %p80 = scmp.ne.s32.totalorder %s71, %s72
    %p81 = scmp.eq.s32.totalorder %s19, 0
    %p82 = por %p80, %p81
    %p83 = scmp.ne.s32.totalorder %s71, %s72
    %p84 = scmp.eq.s32.totalorder %s20, 1
    %p85 = por %p83, %p84
    %p87 = scmp.ne.s32.totalorder %s72, %s86
    %p88 = scmp.eq.s32.totalorder %s20, 0
    %p89 = por %p87, %p88
    %s91 = sadd.s32 %s90, 1
    %p94 = scmp.eq.s32.totalorder %s14, 1
    %p95 = scmp.ne.s32.totalorder %s90, %s92
    %p96 = scmp.eq.s32.totalorder %s14, 0
    %p97 = por %p95, %p96
    %p98 = scmp.ne.s32.totalorder %s90, %s92
    %p99 = scmp.eq.s32.totalorder %s19, 1
    %p100 = por %p98, %p99
    %p101 = scmp.ne.s32.totalorder %s92, %s93
    %p102 = scmp.eq.s32.totalorder %s19, 0
    %p103 = por %p101, %p102
    %p104 = scmp.ne.s32.totalorder %s92, %s93
    %p105 = scmp.eq.s32.totalorder %s20, 1
    %p106 = por %p104, %p105
    %p108 = scmp.ne.s32.totalorder %s93, %s107
    %p109 = scmp.eq.s32.totalorder %s20, 0
    %p110 = por %p108, %p109
    %s112 = sadd.s32 %s111, 1
    %p115 = scmp.eq.s32.totalorder %s14, 1
    %p116 = scmp.ne.s32.totalorder %s111, %s113
    %p117 = scmp.eq.s32.totalorder %s14, 0
    %p118 = por %p116, %p117
    %p119 = scmp.ne.s32.totalorder %s111, %s113
    %p120 = scmp.eq.s32.totalorder %s19, 1
    %p121 = por %p119, %p120
    %p122 = scmp.ne.s32.totalorder %s113, %s114
    %p123 = scmp.eq.s32.totalorder %s19, 0
    %p124 = por %p122, %p123
    %p125 = scmp.ne.s32.totalorder %s113, %s114
    %p126 = scmp.eq.s32.totalorder %s20, 1
    %p127 = por %p125, %p126
    %p129 = scmp.ne.s32.totalorder %s114, %s128
    %p130 = scmp.eq.s32.totalorder %s20, 0
    %p131 = por %p129, %p130
    %s133 = sadd.s32 %s132, 1
    %p136 = scmp.eq.s32.totalorder %s14, 1
    %p137 = scmp.ne.s32.totalorder %s132, %s134
    %p138 = scmp.eq.s32.totalorder %s14, 0
    %p139 = por %p137, %p138
    %p140 = scmp.ne.s32.totalorder %s132, %s134
    %p141 = scmp.eq.s32.totalorder %s19, 1
    %p142 = por %p140, %p141
    %p143 = scmp.ne.s32.totalorder %s134, %s135
    %p144 = scmp.eq.s32.totalorder %s19, 0
    %p145 = por %p143, %p144
    %p146 = scmp.ne.s32.totalorder %s134, %s135
    %p147 = scmp.eq.s32.totalorder %s20, 1
    %p148 = por %p146, %p147
    %p150 = scmp.ne.s32.totalorder %s135, %s149
    %p151 = scmp.eq.s32.totalorder %s20, 0
    %p152 = por %p150, %p151
    %s153 = ssub.s32 %s14, %s21
    %p154 = scmp.eq.s32.totalorder %s153, 0
    %s156 = sadd.s32 %s155, 1
    %s157 = scalar_select %p154, %s155, %s156
    %p160 = pneg %p154
    %p161 = scmp.eq.s32.totalorder %s14, 1
    %p162 = por %p160, %p161
    %p163 = scmp.ne.s32.totalorder %s155, %s158
    %p164 = scmp.eq.s32.totalorder %s14, 0
    %p165 = por %p163, %p164
    %p166 = scmp.ne.s32.totalorder %s155, %s158
    %p167 = scmp.eq.s32.totalorder %s19, 1
    %p168 = por %p166, %p167
    %p169 = scmp.ne.s32.totalorder %s158, %s159
    %p170 = scmp.eq.s32.totalorder %s19, 0
    %p171 = por %p169, %p170
    %p172 = scmp.ne.s32.totalorder %s158, %s159
    %p173 = scmp.eq.s32.totalorder %s20, 1
    %p174 = por %p172, %p173
    %p176 = scmp.ne.s32.totalorder %s159, %s175
    %p177 = scmp.eq.s32.totalorder %s20, 0
    %p178 = por %p176, %p177
    %s179 = ssub.s32 %s14, %s21
    %p180 = scmp.eq.s32.totalorder %s179, 0
    %s182 = sadd.s32 %s181, 1
    %s183 = scalar_select %p180, %s181, %s182
    %p186 = pneg %p180
    %p187 = scmp.eq.s32.totalorder %s14, 1
    %p188 = por %p186, %p187
    %p189 = scmp.ne.s32.totalorder %s181, %s184
    %p190 = scmp.eq.s32.totalorder %s14, 0
    %p191 = por %p189, %p190
    %p192 = scmp.ne.s32.totalorder %s181, %s184
    %p193 = scmp.eq.s32.totalorder %s19, 1
    %p194 = por %p192, %p193
    %p195 = scmp.ne.s32.totalorder %s184, %s185
    %p196 = scmp.eq.s32.totalorder %s19, 0
    %p197 = por %p195, %p196
    %p198 = scmp.ne.s32.totalorder %s184, %s185
    %p199 = scmp.eq.s32.totalorder %s20, 1
    %p200 = por %p198, %p199
    %p202 = scmp.ne.s32.totalorder %s185, %s201
    %p203 = scmp.eq.s32.totalorder %s20, 0
    %p204 = por %p202, %p203
    %p205 = scmp.le.s32.totalorder 1, %s14
    %p206 = scmp.lt.s32.totalorder %s14, 3
    %p207 = pnand %p205, %p206
    %p208 = pneg %p207
    // Predicated region
    $region9: #{double_conv.4} parent=5 // pred_check
      _
    $region10: #{double_conv.4} parent=5 // pred_check_branch
      %210 = sbr.rel (%p207) target = $region12
    $region11: #{double_conv.4} parent=5 // pred_region
      %s211 = ssub.s32 %s14, 1
      // Predicated region
      $region13: #{double_conv.4} parent=11 // pred_check
        %p212 = pneg %p61
      $region14: #{double_conv.4} parent=11 // pred_check_branch
        %214 = sbr.rel (%p212) target = $region16
      $region15: #{double_conv.4} parent=11 // pred_region
        _
      $region16: #{double_conv.4} parent=11 // pred_fallthru
        _
      // Predicated region
      $region17: #{double_conv.4} parent=11 // pred_check
        %p215 = pneg %p82
      $region18: #{double_conv.4} parent=11 // pred_check_branch
        %217 = sbr.rel (%p215) target = $region20
      $region19: #{double_conv.4} parent=11 // pred_region
        _
      $region20: #{double_conv.4} parent=11 // pred_fallthru
        _
      // Predicated region
      $region21: #{double_conv.4} parent=11 // pred_check
        %p218 = pneg %p103
      $region22: #{double_conv.4} parent=11 // pred_check_branch
        %220 = sbr.rel (%p218) target = $region24
      $region23: #{double_conv.4} parent=11 // pred_region
        _
      $region24: #{double_conv.4} parent=11 // pred_fallthru
        _
      // Predicated region
      $region25: #{double_conv.4} parent=11 // pred_check
        %p221 = pneg %p124
      $region26: #{double_conv.4} parent=11 // pred_check_branch
        %223 = sbr.rel (%p221) target = $region28
      $region27: #{double_conv.4} parent=11 // pred_region
        _
      $region28: #{double_conv.4} parent=11 // pred_fallthru
        _
      // Predicated region
      $region29: #{double_conv.4} parent=11 // pred_check
        %p224 = pneg %p145
      $region30: #{double_conv.4} parent=11 // pred_check_branch
        %226 = sbr.rel (%p224) target = $region32
      $region31: #{double_conv.4} parent=11 // pred_region
        _
      $region32: #{double_conv.4} parent=11 // pred_fallthru
        _
    $region12: #{double_conv.4} parent=5 // pred_fallthru
      _
    %p227 = scmp.lt.s32.totalorder %s14, 2
    // Predicated region
    $region33: #{double_conv.4} parent=5 // pred_check
      %p228 = pneg %p227
    $region34: #{double_conv.4} parent=5 // pred_check_branch
      %230 = sbr.rel (%p228) target = $region36
    $region35: #{double_conv.4} parent=5 // pred_region
      // Predicated region
      $region37: #{double_conv.4} parent=35 // pred_check
        %p231 = pneg %p34
      $region38: #{double_conv.4} parent=35 // pred_check_branch
        %233 = sbr.rel (%p231) target = $region40
      $region39: #{double_conv.4} parent=35 // pred_region
        %p234 = scmp.lt.s32.totalorder %s14, 1
        %s235 = scalar_select %p234, %s14, 1
        %s236 = smul.addr %s235, 2
        %s237 = smul.addr %s236, 8
        %s238 = scalar_lea.vmem %s0, %s237
      $region40: #{double_conv.4} parent=35 // pred_fallthru
        _
    $region36: #{double_conv.4} parent=5 // pred_fallthru
      _
    %p239 = scmp.le.s32.totalorder 1, %s14
    %p240 = scmp.lt.s32.totalorder %s14, 3
    %p241 = pnand %p239, %p240
    %p242 = pneg %p241
    // Predicated region
    $region41: #{double_conv.4} parent=5 // pred_check
      _
    $region42: #{double_conv.4} parent=5 // pred_check_branch
      %244 = sbr.rel (%p241) target = $region44
    $region43: #{double_conv.4} parent=5 // pred_region
      %s245 = ssub.s32 %s14, 1
      %p246 = scmp.lt.s32.totalorder %s19, 1
      %s247 = scalar_select %p246, %s19, 1
      %s248 = smul.addr %s247, 2
      %s249 = smul.addr %s248, 8
      %s250 = scalar_lea.vmem %s0, %s249
      %p251 = pneg %p40
      %p252 = pneg %p37
      %p253 = pneg %p61
      %p254 = pneg %p58
      %p255 = pneg %p82
      %p256 = pneg %p79
      %p257 = pneg %p103
      %p258 = pneg %p100
      %p259 = pneg %p124
      %p260 = pneg %p121
      %p261 = pneg %p145
      %p262 = pneg %p142
      %p263 = pneg %p171
      %p264 = pneg %p168
      %p265 = scmp.lt.s32.totalorder %s19, 1
      %s266 = scalar_select %p265, %s19, 1
      %s267 = smul.addr %s266, 2
      %s268 = smul.addr %s267, 8
      %s269 = scalar_lea.vmem %s6, %s268
      %p270 = pneg %p197
      %p271 = pneg %p194
      %p272 = scmp.lt.s32.totalorder %s19, 1
      %s273 = scalar_select %p272, %s19, 1
      %s274 = smul.addr %s273, 8
      %s275 = scalar_lea.vmem %s7, %s274
      %p276 = scmp.lt.s32.totalorder %s19, 1
      %s277 = scalar_select %p276, %s19, 1
      %s278 = smul.addr %s277, 2
      %s279 = smul.addr %s278, 8
      %s280 = scalar_lea.vmem %s0, %s279
      %p281 = scmp.lt.s32.totalorder %s19, 1
      %s282 = scalar_select %p281, %s19, 1
      %s283 = smul.addr %s282, 2
      %s284 = smul.addr %s283, 8
      %s285 = scalar_lea.vmem %s6, %s284
      %p286 = scmp.lt.s32.totalorder %s19, 1
      %s287 = scalar_select %p286, %s19, 1
      %s288 = smul.addr %s287, 8
      %s289 = scalar_lea.vmem %s7, %s288
      %v290 = vld [vmem:[%s280] sm:$0xff]
      %v291 = vld [vmem:[%s280 + $0x8] sm:$0xff]
      %v292 = vld [vmem:[%s2] sm:$0xff]
      %294 = vset.pattern.permute.xlu0 0
      %295 = vperm.xlu0 %294, %v292
      %v296 = vpop.permute.xlu0 %295
      %v298 = vmul.f32 %v290, %v296
      %v299 = vmul.f32 %v291, %v296
      %v300 = vld [vmem:[%s3] sm:$0xff]
      %302 = vset.pattern.permute.xlu0 0
      %303 = vperm.xlu0 %302, %v300
      %v304 = vpop.permute.xlu0 %303
      %v306 = vadd.f32 %v298, %v304
      %v307 = vadd.f32 %v299, %v304
      %vm308 = vcmp.ge.f32.partialorder %v306, 0.0
      %vm309 = vcmp.ge.f32.partialorder %v307, 0.0
      %v310 = vmul.f32 %v306, 0.01
      %v311 = vmul.f32 %v307, 0.01
      %v312 = vsel %vm308, %v306, %v310
      %v313 = vsel %vm309, %v307, %v311
      %v314 = vld [vmem:[%s1] sm:$0xff]
      %v315 = vld [vmem:[%s1 + $0x8] sm:$0xff]
      %v316 = vld [vmem:[%s1 + $0x10] sm:$0xff]
      %v317 = vld [vmem:[%s4] sm:$0x3]
      %v318 = vld [vmem:[%s5] sm:$0x3]
      %321 = vrot.lane.b32.xlu0 %v312, 16
      %v322 = vpop.permute.xlu0 %321
      %323 = vrot.lane.b32.xlu0 %v313, 16
      %v324 = vpop.permute.xlu0 %323
      %vm325 = vcmask 130048
      %v326 = vsel %vm325, %v322, %v324
      %v329 = vsel %vm325, 0.0, %v322
      %330 = vrot.lane.b32.xlu0 %v312, 112
      %v331 = vpop.permute.xlu0 %330
      %332 = vrot.lane.b32.xlu0 %v313, 112
      %v333 = vpop.permute.xlu0 %332
      %vm334 = vcmask 916480
      %v335 = vsel %vm334, %v331, %v333
      %v338 = vsel %vm334, %v333, 0.0
      %vm339 = vcmask 195584
      %v341 = vsel %vm339, %v314, 0
      %343 = vmatprep.subr.mxu0 %v326
      %344 = vmatpush1.msra.mxu0 %v329
      %345 = vmatprep.subr.mxu0 %v313
      %346 = vmatpush1.msra.mxu0 %v312
      %347 = vmatprep.subr.mxu0 %v338
      %348 = vmatpush1.msra.mxu0 %v335
      %349 = vmatprep.subr.mxu0 0.0
      %350 = vmatpush1.msra.mxu0 0.0
      %351 = vmatprep.subr.mxu0 0.0
      %352 = vmatpush1.msra.mxu0 0.0
      %353 = vmatprep.subr.mxu0 0.0
      %354 = vmatpush1.msra.mxu0 0.0
      %355 = vmatprep.subr.mxu0 0.0
      %356 = vmatpush1.msra.mxu0 0.0
      %357 = vmatprep.subr.mxu0 0.0
      %358 = vmatpush1.msra.mxu0 0.0
      %359 = vmatprep.subr.mxu0 0.0
      %360 = vmatpush1.msra.mxu0 0.0
      %361 = vmatprep.subr.mxu0 0.0
      %362 = vmatpush1.msra.mxu0 0.0
      %363 = vmatprep.subr.mxu0 0.0
      %364 = vmatpush1.msra.mxu0 0.0
      %365 = vmatprep.subr.mxu0 0.0
      %366 = vmatpush1.msra.mxu0 0.0
      %367 = vmatprep.subr.mxu0 0.0
      %368 = vmatpush1.msra.mxu0 0.0
      %369 = vmatprep.subr.mxu0 0.0
      %370 = vmatpush1.msra.mxu0 0.0
      %371 = vmatprep.subr.mxu0 0.0
      %372 = vmatpush1.msra.mxu0 0.0
      %373 = vmatprep.subr.mxu0 0.0
      %374 = vmatpush1.msra.mxu0 0.0
      %375 = vmatprep.subr.mxu0 0.0
      %376 = vmatpush1.msra.mxu0 0.0
      %377 = vmatprep.subr.mxu0 0.0
      %378 = vmatpush1.msra.mxu0 0.0
      %379 = vmatprep.subr.mxu0 0.0
      %380 = vmatpush1.msra.mxu0 0.0
      %381 = vmatprep.subr.mxu0 0.0
      %382 = vmatpush1.msra.mxu0 0.0
      %383 = vmatprep.subr.mxu0 0.0
      %384 = vmatpush1.msra.mxu0 0.0
      %385 = vmatprep.subr.mxu0 0.0
      %386 = vmatpush1.msra.mxu0 0.0
      %387 = vmatprep.subr.mxu0 0.0
      %388 = vmatpush1.msra.mxu0 0.0
      %389 = vmatprep.subr.mxu0 0.0
      %390 = vmatpush1.msra.mxu0 0.0
      %391 = vmatprep.subr.mxu0 0.0
      %392 = vmatpush1.msra.mxu0 0.0
      %393 = vmatprep.subr.mxu0 0.0
      %394 = vmatpush1.msra.mxu0 0.0
      %395 = vmatprep.subr.mxu0 0.0
      %396 = vmatpush1.msra.mxu0 0.0
      %397 = vmatprep.subr.mxu0 0.0
      %398 = vmatpush1.msra.mxu0 0.0
      %399 = vmatprep.subr.mxu0 0.0
      %400 = vmatpush1.msra.mxu0 0.0
      %401 = vmatprep.subr.mxu0 0.0
      %402 = vmatpush1.msra.mxu0 0.0
      %403 = vmatprep.subr.mxu0 0.0
      %404 = vmatpush1.msra.mxu0 0.0
      %405 = vmatprep.subr.mxu0 0.0
      %406 = vmatpush1.msra.mxu0 0.0
      %407 = vmatprep.mubr.f32.mxu0 0.0
      %408 = vmatmul.mubr.f32.gmra.mrb[0].mxu0 %v341
      %v409 = vpop.f32.mrb[0].mxu0
      %v410 = vadd.f32 0.0, %v409
      %v411 = vpop.f32.mrb[0].mxu0
      %v412 = vadd.f32 0.0, %v411
      %413 = vdwg.mxu0
      %v415 = vsel %vm339, %v316, 0
      %417 = vmatprep.subr.mxu0 %v326
      %418 = vmatpush1.msra.mxu0 %v329
      %419 = vmatprep.subr.mxu0 %v313
      %420 = vmatpush1.msra.mxu0 %v312
      %421 = vmatprep.subr.mxu0 %v338
      %422 = vmatpush1.msra.mxu0 %v335
      %423 = vmatprep.subr.mxu0 0.0
      %424 = vmatpush1.msra.mxu0 0.0
      %425 = vmatprep.subr.mxu0 0.0
      %426 = vmatpush1.msra.mxu0 0.0
      %427 = vmatprep.subr.mxu0 0.0
      %428 = vmatpush1.msra.mxu0 0.0
      %429 = vmatprep.subr.mxu0 0.0
      %430 = vmatpush1.msra.mxu0 0.0
      %431 = vmatprep.subr.mxu0 0.0
      %432 = vmatpush1.msra.mxu0 0.0
      %433 = vmatprep.subr.mxu0 0.0
      %434 = vmatpush1.msra.mxu0 0.0
      %435 = vmatprep.subr.mxu0 0.0
      %436 = vmatpush1.msra.mxu0 0.0
      %437 = vmatprep.subr.mxu0 0.0
      %438 = vmatpush1.msra.mxu0 0.0
      %439 = vmatprep.subr.mxu0 0.0
      %440 = vmatpush1.msra.mxu0 0.0
      %441 = vmatprep.subr.mxu0 0.0
      %442 = vmatpush1.msra.mxu0 0.0
      %443 = vmatprep.subr.mxu0 0.0
      %444 = vmatpush1.msra.mxu0 0.0
      %445 = vmatprep.subr.mxu0 0.0
      %446 = vmatpush1.msra.mxu0 0.0
      %447 = vmatprep.subr.mxu0 0.0
      %448 = vmatpush1.msra.mxu0 0.0
      %449 = vmatprep.subr.mxu0 0.0
      %450 = vmatpush1.msra.mxu0 0.0
      %451 = vmatprep.subr.mxu0 0.0
      %452 = vmatpush1.msra.mxu0 0.0
      %453 = vmatprep.subr.mxu0 0.0
      %454 = vmatpush1.msra.mxu0 0.0
      %455 = vmatprep.subr.mxu0 0.0
      %456 = vmatpush1.msra.mxu0 0.0
      %457 = vmatprep.subr.mxu0 0.0
      %458 = vmatpush1.msra.mxu0 0.0
      %459 = vmatprep.subr.mxu0 0.0
      %460 = vmatpush1.msra.mxu0 0.0
      %461 = vmatprep.subr.mxu0 0.0
      %462 = vmatpush1.msra.mxu0 0.0
      %463 = vmatprep.subr.mxu0 0.0
      %464 = vmatpush1.msra.mxu0 0.0
      %465 = vmatprep.subr.mxu0 0.0
      %466 = vmatpush1.msra.mxu0 0.0
      %467 = vmatprep.subr.mxu0 0.0
      %468 = vmatpush1.msra.mxu0 0.0
      %469 = vmatprep.subr.mxu0 0.0
      %470 = vmatpush1.msra.mxu0 0.0
      %471 = vmatprep.subr.mxu0 0.0
      %472 = vmatpush1.msra.mxu0 0.0
      %473 = vmatprep.subr.mxu0 0.0
      %474 = vmatpush1.msra.mxu0 0.0
      %475 = vmatprep.subr.mxu0 0.0
      %476 = vmatpush1.msra.mxu0 0.0
      %477 = vmatprep.subr.mxu0 0.0
      %478 = vmatpush1.msra.mxu0 0.0
      %479 = vmatprep.subr.mxu0 0.0
      %480 = vmatpush1.msra.mxu0 0.0
      %481 = vmatprep.mubr.f32.mxu0 0.0
      %482 = vmatmul.mubr.f32.gmra.mrb[0].mxu0 %v415
      %v483 = vpop.f32.mrb[0].mxu0
      %v484 = vadd.f32 0.0, %v483
      %v485 = vpop.f32.mrb[0].mxu0
      %v486 = vadd.f32 0.0, %v485
      %487 = vdwg.mxu0
      %490 = vrot.lane.b32.xlu0 %v410, 1
      %v491 = vpop.permute.xlu0 %490
      %492 = vrot.lane.b32.xlu0 %v412, 1
      %v493 = vpop.permute.xlu0 %492
      %vm494 = vcmask 7168
      %v495 = vsel %vm494, %v491, %v493
      %v498 = vsel %vm494, 0.0, %v491
      %501 = vrot.lane.b32.xlu0 %v484, 127
      %v502 = vpop.permute.xlu0 %501
      %503 = vrot.lane.b32.xlu0 %v486, 127
      %v504 = vpop.permute.xlu0 %503
      %vm505 = vcmask 1039360
      %v506 = vsel %vm505, %v502, %v504
      %v509 = vsel %vm505, %v504, 0.0
      %v511 = vlaneseq
      %v512 = vshrl.u32 %v511, 7
      %v513 = vsub.s32 0, %v512
      %v514 = vrot.slane %v317, %v513
      %v515 = vlaneseq
      %v516 = vshrl.u32 %v515, 7
      %v517 = vsub.s32 1, %v516
      %v518 = vrot.slane %v317, %v517
      %v521 = vmul.f32 %v514, %v498
      %v522 = vmul.f32 %v518, %v495
      %v524 = vsel %vm339, %v315, 0
      %526 = vmatprep.subr.mxu0 %v326
      %527 = vmatpush1.msra.mxu0 %v329
      %528 = vmatprep.subr.mxu0 %v313
      %529 = vmatpush1.msra.mxu0 %v312
      %530 = vmatprep.subr.mxu0 %v338
      %531 = vmatpush1.msra.mxu0 %v335
      %532 = vmatprep.subr.mxu0 0.0
      %533 = vmatpush1.msra.mxu0 0.0
      %534 = vmatprep.subr.mxu0 0.0
      %535 = vmatpush1.msra.mxu0 0.0
      %536 = vmatprep.subr.mxu0 0.0
      %537 = vmatpush1.msra.mxu0 0.0
      %538 = vmatprep.subr.mxu0 0.0
      %539 = vmatpush1.msra.mxu0 0.0
      %540 = vmatprep.subr.mxu0 0.0
      %541 = vmatpush1.msra.mxu0 0.0
      %542 = vmatprep.subr.mxu0 0.0
      %543 = vmatpush1.msra.mxu0 0.0
      %544 = vmatprep.subr.mxu0 0.0
      %545 = vmatpush1.msra.mxu0 0.0
      %546 = vmatprep.subr.mxu0 0.0
      %547 = vmatpush1.msra.mxu0 0.0
      %548 = vmatprep.subr.mxu0 0.0
      %549 = vmatpush1.msra.mxu0 0.0
      %550 = vmatprep.subr.mxu0 0.0
      %551 = vmatpush1.msra.mxu0 0.0
      %552 = vmatprep.subr.mxu0 0.0
      %553 = vmatpush1.msra.mxu0 0.0
      %554 = vmatprep.subr.mxu0 0.0
      %555 = vmatpush1.msra.mxu0 0.0
      %556 = vmatprep.subr.mxu0 0.0
      %557 = vmatpush1.msra.mxu0 0.0
      %558 = vmatprep.subr.mxu0 0.0
      %559 = vmatpush1.msra.mxu0 0.0
      %560 = vmatprep.subr.mxu0 0.0
      %561 = vmatpush1.msra.mxu0 0.0
      %562 = vmatprep.subr.mxu0 0.0
      %563 = vmatpush1.msra.mxu0 0.0
      %564 = vmatprep.subr.mxu0 0.0
      %565 = vmatpush1.msra.mxu0 0.0
      %566 = vmatprep.subr.mxu0 0.0
      %567 = vmatpush1.msra.mxu0 0.0
      %568 = vmatprep.subr.mxu0 0.0
      %569 = vmatpush1.msra.mxu0 0.0
      %570 = vmatprep.subr.mxu0 0.0
      %571 = vmatpush1.msra.mxu0 0.0
      %572 = vmatprep.subr.mxu0 0.0
      %573 = vmatpush1.msra.mxu0 0.0
      %574 = vmatprep.subr.mxu0 0.0
      %575 = vmatpush1.msra.mxu0 0.0
      %576 = vmatprep.subr.mxu0 0.0
      %577 = vmatpush1.msra.mxu0 0.0
      %578 = vmatprep.subr.mxu0 0.0
      %579 = vmatpush1.msra.mxu0 0.0
      %580 = vmatprep.subr.mxu0 0.0
      %581 = vmatpush1.msra.mxu0 0.0
      %582 = vmatprep.subr.mxu0 0.0
      %583 = vmatpush1.msra.mxu0 0.0
      %584 = vmatprep.subr.mxu0 0.0
      %585 = vmatpush1.msra.mxu0 0.0
      %586 = vmatprep.subr.mxu0 0.0
      %587 = vmatpush1.msra.mxu0 0.0
      %588 = vmatprep.subr.mxu0 0.0
      %589 = vmatpush1.msra.mxu0 0.0
      %590 = vmatprep.mubr.f32.mxu0 0.0
      %591 = vmatmul.mubr.f32.gmra.mrb[0].mxu0 %v524
      %v592 = vpop.f32.mrb[0].mxu0
      %v593 = vadd.f32 %v521, %v592
      %v594 = vpop.f32.mrb[0].mxu0
      %v595 = vadd.f32 %v522, %v594
      %596 = vdwg.mxu0
      %v598 = vlaneseq
      %v599 = vshrl.u32 %v598, 7
      %v600 = vsub.s32 0, %v599
      %v601 = vrot.slane %v318, %v600
      %v602 = vlaneseq
      %v603 = vshrl.u32 %v602, 7
      %v604 = vsub.s32 1, %v603
      %v605 = vrot.slane %v318, %v604
      %v608 = vmul.f32 %v601, %v506
      %v609 = vmul.f32 %v605, %v509
      %v610 = vadd.f32 %v593, %v608
      %v611 = vadd.f32 %v595, %v609
      %v612 = vadd.f32 %v610, %v611
      %613 = vadd.xlane.f32.xlu0 %v612
      %v614 = vpop.xlane.xlu0 %613
      %v615 = vmul.f32 %v610, %v610
      %v616 = vmul.f32 %v611, %v611
      %v617 = vadd.f32 %v615, %v616
      %618 = vadd.xlane.f32.xlu0 %v617
      %v619 = vpop.xlane.xlu0 %618
      %v620 = vsel %vm494, %v614, %v619
      %vm621 = vcmask 15360
      %622 = vst.msk [vmem:[%s289] sm:$0xff] %vm621, %v620
      %623 = vst [vmem:[%s285] sm:$0xff] %v610
      %624 = vst [vmem:[%s285 + $0x8] sm:$0xff] %v611
      %p625 = scmp.lt.s32.totalorder %s19, 1
      %s626 = scalar_select %p625, %s19, 1
      %s627 = smul.addr %s626, 2
      %s628 = smul.addr %s627, 8
      %s629 = scalar_lea.vmem %s6, %s628
      %p630 = scmp.lt.s32.totalorder %s19, 1
      %s631 = scalar_select %p630, %s19, 1
      %s632 = smul.addr %s631, 8
      %s633 = scalar_lea.vmem %s7, %s632
      // Predicated region
      $region45: #{double_conv.4} parent=43 // pred_check
        %p634 = pneg %p168
      $region46: #{double_conv.4} parent=43 // pred_check_branch
        %636 = sbr.rel (%p634) target = $region48
      $region47: #{double_conv.4} parent=43 // pred_region
        _
      $region48: #{double_conv.4} parent=43 // pred_fallthru
        _
      // Predicated region
      $region49: #{double_conv.4} parent=43 // pred_check
        %p637 = pneg %p194
      $region50: #{double_conv.4} parent=43 // pred_check_branch
        %639 = sbr.rel (%p637) target = $region52
      $region51: #{double_conv.4} parent=43 // pred_region
        _
      $region52: #{double_conv.4} parent=43 // pred_fallthru
        _
    $region44: #{double_conv.4} parent=5 // pred_fallthru
      _
    %p640 = scmp.le.s32.totalorder 2, %s14
    // Predicated region
    $region53: #{double_conv.4} parent=5 // pred_check
      %p641 = pneg %p640
    $region54: #{double_conv.4} parent=5 // pred_check_branch
      %643 = sbr.rel (%p641) target = $region56
    $region55: #{double_conv.4} parent=5 // pred_region
      %s644 = ssub.s32 %s14, 2
      // Predicated region
      $region57: #{double_conv.4} parent=55 // pred_check
        %p645 = pneg %p174
      $region58: #{double_conv.4} parent=55 // pred_check_branch
        %647 = sbr.rel (%p645) target = $region60
      $region59: #{double_conv.4} parent=55 // pred_region
        %p648 = scmp.lt.s32.totalorder %s20, 1
        %s649 = scalar_select %p648, %s20, 1
        %s650 = smul.addr %s649, 2
        %s651 = smul.addr %s650, 8
        %s652 = scalar_lea.vmem %s6, %s651
      $region60: #{double_conv.4} parent=55 // pred_fallthru
        _
      // Predicated region
      $region61: #{double_conv.4} parent=55 // pred_check
        %p653 = pneg %p200
      $region62: #{double_conv.4} parent=55 // pred_check_branch
        %655 = sbr.rel (%p653) target = $region64
      $region63: #{double_conv.4} parent=55 // pred_region
        %p656 = scmp.lt.s32.totalorder %s20, 1
        %s657 = scalar_select %p656, %s20, 1
        %s658 = smul.addr %s657, 8
        %s659 = scalar_lea.vmem %s7, %s658
      $region64: #{double_conv.4} parent=55 // pred_fallthru
        _
    $region56: #{double_conv.4} parent=5 // pred_fallthru
      _
  $region6: #{double_conv.4} parent=0 // loop_footer
    %s18 = sadd.s32 1, %s14
  $region7: #{double_conv.4} parent=0 // loop_footer_branch
    %13 = sbr.rel target = $region3
  $region8: #{double_conv.4} parent=0 // loop_exit
    _

</llo_original>
